<compile_context>
chip_gen: v7x
topology: tpu7x:2x2x1
jax: 0.10.0
libtpu: 0.0.40
codegen_flags: <defaults>
</compile_context>

<pallas_src>
import functools

import numpy as np

import jax
import jax.numpy as jnp
from jax.experimental import pallas as pl
from jax.experimental.pallas import tpu as pltpu


def _round_up(v, m):
    return ((v + m - 1) // m) * m


def _default_block_b(B):
    """Problems per grid step.

    Multiple of 8 (output (Bt, 128) tiling), large enough to amortize the
    per-grid-step overhead, small enough to keep >= 2 grid steps once B >= 16
    (v7x dual TensorCore) and to stay far under v7x's 64 MiB VMEM.
    """
    if B <= 8:
        return 8
    half = max(8, ((_round_up(B, 8) // 2) // 8) * 8)
    return min(32, half)


def _problem_loss(x, mask_f, avg, ones_row, *, margin, num_pid, M):
    """IPC_v2 loss for one (M, D) f32 problem in transposed (N, M) layout.

    mask_f / avg / ones_row are per-grid-step constants passed in (hoisted out
    of the unrolled per-problem loop).
    """
    N = num_pid

    # Centroids via MXU: (N, M) @ (M, D) -> (N, D).
    xcen = jax.lax.dot_general(
        avg, x, (((1,), (0,)), ((), ())),
        preferred_element_type=jnp.float32)

    # Squared-euclidean pairwise distance pieces, (N, M) layout (M on lanes).
    xcen_sq = jnp.sum(xcen * xcen, axis=1, keepdims=True)          # (N, 1)
    x_sq_row = jax.lax.dot_general(                                # (1, M)
        ones_row, x * x, (((1,), (1,)), ((), ())),
        preferred_element_type=jnp.float32)
    cross = jax.lax.dot_general(                                   # (N, M)
        xcen, x, (((1,), (1,)), ((), ())),
        preferred_element_type=jnp.float32)

    dist2 = xcen_sq + x_sq_row - 2.0 * cross
    # TODO(synk): if this loss is differentiated, the 1e-12 floor makes
    # d(sqrt)/d(dist2) huge at zero distance; consider a larger eps there.
    dist = jnp.sqrt(jnp.maximum(dist2, 1e-12))                     # (N, M)

    # Each sample matches exactly one centroid -> compile-time counts:
    # pos count == M, neg count == M * (N - 1).
    pos = jnp.sum(dist * mask_f) * (1.0 / M)
    neg = jnp.sum(jnp.maximum(margin - dist, 0.0) * (1.0 - mask_f)) * (
        1.0 / (M * (N - 1)))
    return pos + neg


def _ipc_v2_blocked_kernel(x_ref, out_ref, *, num_pid, k, margin, block_b):
    """One grid step: block_b problems, losses written as (1, 128) lane rows."""
    N = num_pid
    _, M, D = x_ref.shape
    total = N * k

    # ---- hoisted constants, built once per grid step (NOT per problem) ----
    # Structural pid selector sel[j, i] = ((i % total) // k == j), from iota +
    # integer compares only (no vector int div/mod).
    jj = jax.lax.broadcasted_iota(jnp.int32, (N, M), 0)
    ii = jax.lax.broadcasted_iota(jnp.int32, (N, M), 1)
    im = ii - total * ((ii >= total).astype(jnp.int32)
                       + (ii >= 2 * total).astype(jnp.int32))      # ii % total
    base = jj * k
    sel = jnp.logical_and(im >= base, im < base + k)
    mask_f = sel.astype(jnp.float32)                               # (N, M) pid mask
    avg = mask_f * (1.0 / (3.0 * k))                               # (N, M) averaging
    ones_row = jnp.ones((1, D), jnp.float32)

    def body(b, carry):
        # bf16 or f32 block -> f32 in VMEM (compute stays f32 everywhere).
        x = x_ref[b].astype(jnp.float32)
        loss = _problem_loss(x, mask_f, avg, ones_row,
                             margin=margin, num_pid=N, M=M)
        # One full-lane row per problem: unmasked, lane-dense store.
        out_ref[pl.ds(b, 1), :] = jnp.full((1, 128), loss, jnp.float32)
        return carry

    jax.lax.fori_loop(0, block_b, body, 0, unroll=True)


def ipc_v2_loss_batched(xb, num_pid, k, margin=0.6, block_b=None):
    """Batched IPC_v2 over B independent problems.

    xb : (B, 3 * num_pid * k, D), f32 or bf16 -> (B,) float32 losses.
    bf16 inputs are DMA'd as bf16 and upcast to f32 inside the kernel.
    """
    if num_pid < 2:
        raise ValueError("IPC_v2 needs num_pid >= 2 (negative-pair mean is "
                         "undefined for a single identity).")
    B, M, D = xb.shape
    if M != 3 * num_pid * k:
        raise ValueError(f"expected M == 3*num_pid*k == {3 * num_pid * k}, got {M}")

    # Keep bf16 as bf16 (halve input DMA); everything else goes to f32.
    if xb.dtype != jnp.bfloat16:
        xb = xb.astype(jnp.float32)

    if block_b is None:
        block_b = _default_block_b(B)
    block_b = max(8, (block_b // 8) * 8)

    b_pad = _round_up(B, block_b)
    if b_pad != B:
        xb = jnp.pad(xb, ((0, b_pad - B), (0, 0), (0, 0)))
    grid = (b_pad // block_b,)

    kernel = functools.partial(
        _ipc_v2_blocked_kernel, num_pid=num_pid, k=k,
        margin=float(margin), block_b=block_b)

    cost = pl.CostEstimate(
        flops=int(b_pad) * (4 * num_pid * M * D + 3 * M * D),
        transcendentals=int(b_pad) * num_pid * M,
        bytes_accessed=int(b_pad) * M * D * xb.dtype.itemsize + b_pad * 128 * 4)

    out = pl.pallas_call(
        kernel,
        out_shape=jax.ShapeDtypeStruct((b_pad, 128), jnp.float32),
        grid=grid,
        in_specs=[pl.BlockSpec((block_b, M, D), lambda i: (i, 0, 0))],
        out_specs=pl.BlockSpec((block_b, 128), lambda i: (i, 0)),
        compiler_params=pltpu.CompilerParams(
            dimension_semantics=("parallel",)),
        cost_estimate=cost,
    )(xb)
    return out[:B, 0]


def ipc_v2_loss(x, pids, num_pid, margin=0.6, validate_pids=False):
    """Pallas implementation of IPC_v2.forward(x, pids) for one problem.

    x    : (3 * num_pid * k, D)
    pids : (num_pid * k,) int, grouped so pids.reshape(num_pid, -1) has k
           identical contiguous entries per row (same structural assumption the
           PyTorch module's reshape-based centroid relies on; pid values are
           not needed by the kernel — structure is derived from shapes).
    Routed through the batched kernel (B=1): launch overhead dominates at this
    size, so a bespoke single-problem kernel buys nothing.
    """
    total = int(pids.shape[0])
    if total % num_pid != 0:
        raise ValueError("len(pids) must be a multiple of num_pid")
    k = total // num_pid

    if validate_pids:
        try:
            p = np.asarray(jax.device_get(pids)).reshape(num_pid, -1)
        except Exception:
            p = None   # traced inside jit; skip the host-side debug check
        if p is not None and (not (p == p[:, :1]).all()
                              or len(np.unique(p[:, 0])) != num_pid):
            raise ValueError(
                "pids must be k contiguous copies of each of num_pid distinct "
                "ids (matching pids.reshape(num_pid, -1))")

    return ipc_v2_loss_batched(x[None], num_pid, k, margin=margin)[0]


def ipc_v2_ref(x, pids, num_pid, margin=0.6):
    """Pure-JAX reference mirroring the PyTorch module."""
    x = x.astype(jnp.float32)
    d = x.shape[-1]
    pidcen = pids.reshape(num_pid, -1)[:, 0]
    xc = x.reshape(3 * num_pid, -1, d)
    xc = jnp.concatenate(
        [xc[:num_pid], xc[num_pid:2 * num_pid], xc[2 * num_pid:]], axis=1)
    xcen = xc.mean(axis=1)
    p1 = jnp.concatenate([pids, pids, pids])
    dist = ((x ** 2).sum(1, keepdims=True) + (xcen ** 2).sum(1)[None, :]
            - 2.0 * x @ xcen.T)
    dist = jnp.sqrt(jnp.clip(dist, 1e-12))
    mask = (p1[:, None] == pidcen[None, :]).astype(jnp.float32)
    pos = (dist * mask).sum() / mask.sum()
    neg = (jnp.clip(margin - dist, 0.0) * (1.0 - mask)).sum() / (1.0 - mask).sum()
    return pos + neg


if __name__ == "__main__":
    # Small shapes consistent with the module's forward:
    #   num_pid identities, k samples per identity per block, 3 blocks.
    num_pid, k, D = 8, 4, 128
    total = num_pid * k
    M = 3 * total                                      # 96 samples per problem

    key = jax.random.PRNGKey(0)
    x = jax.random.normal(key, (M, D), dtype=jnp.float32)
    # pids: each identity appears k contiguous times (matches reshape(num_pid,-1)).
    pids = jnp.repeat(jnp.arange(num_pid, dtype=jnp.int32), k)

    loss = jax.block_until_ready(
        ipc_v2_loss(x, pids, num_pid, margin=0.6, validate_pids=True))
    ref = jax.block_until_ready(ipc_v2_ref(x, pids, num_pid, margin=0.6))
    assert jnp.allclose(loss, ref, atol=1e-4, rtol=1e-4), (loss, ref)

    # Batched path: B problems, Bt per grid step (B padded to a Bt multiple).
    B = 20
    xb = jax.random.normal(jax.random.PRNGKey(1), (B, M, D), dtype=jnp.float32)
    losses = jax.block_until_ready(ipc_v2_loss_batched(xb, num_pid, k, margin=0.6))
    refs = jnp.stack(
        [ipc_v2_ref(xb[b], pids, num_pid, margin=0.6) for b in range(B)])
    assert jnp.allclose(losses, refs, atol=1e-4, rtol=1e-4), (losses, refs)

    # bf16 input path: bf16 DMA, f32 compute inside the kernel.
    xb16 = xb.astype(jnp.bfloat16)
    losses16 = jax.block_until_ready(
        ipc_v2_loss_batched(xb16, num_pid, k, margin=0.6))
    refs16 = jnp.stack(
        [ipc_v2_ref(xb16[b].astype(jnp.float32), pids, num_pid, margin=0.6)
         for b in range(B)])
    assert jnp.allclose(losses16, refs16, atol=1e-3, rtol=1e-3), (losses16, refs16)

    print("KERNEL_OK")
</pallas_src>

<mosaic_0001>
module attributes {stable_mosaic.version = 11 : i64} {
  func.func @_ipc_v2_blocked_kernel(%arg0: i32, %arg1: memref<8x96x128xf32, #tpu.memory_space<vmem>>, %arg2: memref<8x128xf32, #tpu.memory_space<vmem>>) attributes {dimension_semantics = [#tpu.dimension_semantics<parallel>], iteration_bounds = array<i64: 1>, scalar_prefetch = 0 : i64, scratch_operands = 0 : i64, tpu.core_type = #tpu.core_type<tc>, window_params = [{transform_indices = @transform_0, window_bounds = array<i64: 8, 96, 128>}, {transform_indices = @transform_1, window_bounds = array<i64: 8, 128>}]} {
    %0 = tpu.iota {dimensions = array<i32: 0>} : vector<8x96xi32>
    %1 = tpu.iota {dimensions = array<i32: 1>} : vector<8x96xi32>
    %c32_i32 = arith.constant 32 : i32
    %2 = vector.broadcast %c32_i32 : i32 to vector<8x96xi32>
    %3 = arith.cmpi sge, %1, %2 : vector<8x96xi32>
    %4 = arith.extui %3 : vector<8x96xi1> to vector<8x96xi32>
    %c64_i32 = arith.constant 64 : i32
    %5 = vector.broadcast %c64_i32 : i32 to vector<8x96xi32>
    %6 = arith.cmpi sge, %1, %5 : vector<8x96xi32>
    %7 = arith.extui %6 : vector<8x96xi1> to vector<8x96xi32>
    %8 = arith.addi %4, %7 : vector<8x96xi32>
    %c32_i32_0 = arith.constant 32 : i32
    %9 = vector.broadcast %c32_i32_0 : i32 to vector<8x96xi32>
    %10 = arith.muli %9, %8 : vector<8x96xi32>
    %11 = arith.subi %1, %10 : vector<8x96xi32>
    %c4_i32 = arith.constant 4 : i32
    %12 = vector.broadcast %c4_i32 : i32 to vector<8x96xi32>
    %13 = arith.muli %0, %12 : vector<8x96xi32>
    %14 = arith.cmpi sge, %11, %13 : vector<8x96xi32>
    %c4_i32_1 = arith.constant 4 : i32
    %15 = vector.broadcast %c4_i32_1 : i32 to vector<8x96xi32>
    %16 = arith.addi %13, %15 : vector<8x96xi32>
    %17 = arith.cmpi slt, %11, %16 : vector<8x96xi32>
    %18 = arith.andi %14, %17 : vector<8x96xi1>
    %19 = arith.extui %18 : vector<8x96xi1> to vector<8x96xi32>
    %20 = arith.sitofp %19 : vector<8x96xi32> to vector<8x96xf32>
    %cst = arith.constant 0.0833333358 : f32
    %21 = vector.broadcast %cst : f32 to vector<8x96xf32>
    %22 = arith.mulf %20, %21 : vector<8x96xf32>
    %cst_2 = arith.constant 1.000000e+00 : f32
    %23 = vector.broadcast %cst_2 : f32 to vector<1x128xf32>
    %c0_i32 = arith.constant 0 : i32
    %24 = arith.index_cast %c0_i32 : i32 to index
    %c0 = arith.constant 0 : index
    %c0_3 = arith.constant 0 : index
    %25 = vector.load %arg1[%24, %c0, %c0_3] : memref<8x96x128xf32, #tpu.memory_space<vmem>>, vector<1x96x128xf32>
    %26 = vector.shape_cast %25 : vector<1x96x128xf32> to vector<96x128xf32>
    %cst_4 = arith.constant dense<0.000000e+00> : vector<8x128xf32>
    %27 = tpu.matmul %22, %26, %cst_4 {dimension_numbers = #tpu.dot_dimension_numbers<[1], [0], [0], [1], [0, 0, 1, 1], [], []>} : vector<8x96xf32>, vector<96x128xf32>, vector<8x128xf32> -> vector<8x128xf32>
    %28 = arith.mulf %27, %27 : vector<8x128xf32>
    %cst_5 = arith.constant dense<0.000000e+00> : vector<8xf32>
    %29 = vector.multi_reduction <add>, %28, %cst_5 [1] : vector<8x128xf32> to vector<8xf32>
    %30 = vector.shape_cast %29 : vector<8xf32> to vector<8x1xf32>
    %31 = arith.mulf %26, %26 : vector<96x128xf32>
    %cst_6 = arith.constant dense<0.000000e+00> : vector<1x96xf32>
    %32 = tpu.matmul %23, %31, %cst_6 {dimension_numbers = #tpu.dot_dimension_numbers<[1], [1], [0], [0], [0, 0, 1, 0], [], []>} : vector<1x128xf32>, vector<96x128xf32>, vector<1x96xf32> -> vector<1x96xf32>
    %cst_7 = arith.constant dense<0.000000e+00> : vector<8x96xf32>
    %33 = tpu.matmul %27, %26, %cst_7 {dimension_numbers = #tpu.dot_dimension_numbers<[1], [1], [0], [0], [0, 0, 1, 0], [], []>} : vector<8x128xf32>, vector<96x128xf32>, vector<8x96xf32> -> vector<8x96xf32>
    %34 = vector.broadcast %30 : vector<8x1xf32> to vector<8x96xf32>
    %35 = vector.broadcast %32 : vector<1x96xf32> to vector<8x96xf32>
    %36 = arith.addf %34, %35 : vector<8x96xf32>
    %cst_8 = arith.constant 2.000000e+00 : f32
    %37 = vector.broadcast %cst_8 : f32 to vector<8x96xf32>
    %38 = arith.mulf %37, %33 : vector<8x96xf32>
    %39 = arith.subf %36, %38 : vector<8x96xf32>
    %cst_9 = arith.constant 9.99999996E-13 : f32
    %40 = vector.broadcast %cst_9 : f32 to vector<8x96xf32>
    %41 = arith.maximumf %39, %40 : vector<8x96xf32>
    %42 = math.sqrt %41 : vector<8x96xf32>
    %43 = arith.mulf %42, %20 : vector<8x96xf32>
    %44 = vector.shape_cast %43 : vector<8x96xf32> to vector<1x8x96xf32>
    %cst_10 = arith.constant dense<0.000000e+00> : vector<1xf32>
    %45 = vector.multi_reduction <add>, %44, %cst_10 [1, 2] : vector<1x8x96xf32> to vector<1xf32>
    %46 = vector.shape_cast %45 : vector<1xf32> to vector<1x1x1xf32>
    %47 = vector.extract %46[0, 0, 0] : f32 from vector<1x1x1xf32>
    %cst_11 = arith.constant 0.010416667 : f32
    %48 = arith.mulf %47, %cst_11 : f32
    %cst_12 = arith.constant 6.000000e-01 : f32
    %49 = vector.broadcast %cst_12 : f32 to vector<8x96xf32>
    %50 = arith.subf %49, %42 : vector<8x96xf32>
    %cst_13 = arith.constant 0.000000e+00 : f32
    %51 = vector.broadcast %cst_13 : f32 to vector<8x96xf32>
    %52 = arith.maximumf %50, %51 : vector<8x96xf32>
    %cst_14 = arith.constant 1.000000e+00 : f32
    %53 = vector.broadcast %cst_14 : f32 to vector<8x96xf32>
    %54 = arith.subf %53, %20 : vector<8x96xf32>
    %55 = arith.mulf %52, %54 : vector<8x96xf32>
    %56 = vector.shape_cast %55 : vector<8x96xf32> to vector<1x8x96xf32>
    %cst_15 = arith.constant dense<0.000000e+00> : vector<1xf32>
    %57 = vector.multi_reduction <add>, %56, %cst_15 [1, 2] : vector<1x8x96xf32> to vector<1xf32>
    %58 = vector.shape_cast %57 : vector<1xf32> to vector<1x1x1xf32>
    %59 = vector.extract %58[0, 0, 0] : f32 from vector<1x1x1xf32>
    %cst_16 = arith.constant 0.00148809527 : f32
    %60 = arith.mulf %59, %cst_16 : f32
    %61 = arith.addf %48, %60 : f32
    %62 = vector.broadcast %61 : f32 to vector<1x128xf32>
    %63 = arith.index_cast %c0_i32 : i32 to index
    %c0_17 = arith.constant 0 : index
    %64 = vector.load %arg2[%63, %c0_17] : memref<8x128xf32, #tpu.memory_space<vmem>>, vector<1x128xf32>
    tpu.vector_store %arg2[%63, %c0_17], %62 {strides = array<i32>} : memref<8x128xf32, #tpu.memory_space<vmem>>, vector<1x128xf32>,
    %c1_i32 = arith.constant 1 : i32
    %65 = arith.index_cast %c1_i32 : i32 to index
    %c0_18 = arith.constant 0 : index
    %c0_19 = arith.constant 0 : index
    %66 = vector.load %arg1[%65, %c0_18, %c0_19] : memref<8x96x128xf32, #tpu.memory_space<vmem>>, vector<1x96x128xf32>
    %67 = vector.shape_cast %66 : vector<1x96x128xf32> to vector<96x128xf32>
    %cst_20 = arith.constant dense<0.000000e+00> : vector<8x128xf32>
    %68 = tpu.matmul %22, %67, %cst_20 {dimension_numbers = #tpu.dot_dimension_numbers<[1], [0], [0], [1], [0, 0, 1, 1], [], []>} : vector<8x96xf32>, vector<96x128xf32>, vector<8x128xf32> -> vector<8x128xf32>
    %69 = arith.mulf %68, %68 : vector<8x128xf32>
    %cst_21 = arith.constant dense<0.000000e+00> : vector<8xf32>
    %70 = vector.multi_reduction <add>, %69, %cst_21 [1] : vector<8x128xf32> to vector<8xf32>
    %71 = vector.shape_cast %70 : vector<8xf32> to vector<8x1xf32>
    %72 = arith.mulf %67, %67 : vector<96x128xf32>
    %cst_22 = arith.constant dense<0.000000e+00> : vector<1x96xf32>
    %73 = tpu.matmul %23, %72, %cst_22 {dimension_numbers = #tpu.dot_dimension_numbers<[1], [1], [0], [0], [0, 0, 1, 0], [], []>} : vector<1x128xf32>, vector<96x128xf32>, vector<1x96xf32> -> vector<1x96xf32>
    %cst_23 = arith.constant dense<0.000000e+00> : vector<8x96xf32>
    %74 = tpu.matmul %68, %67, %cst_23 {dimension_numbers = #tpu.dot_dimension_numbers<[1], [1], [0], [0], [0, 0, 1, 0], [], []>} : vector<8x128xf32>, vector<96x128xf32>, vector<8x96xf32> -> vector<8x96xf32>
    %75 = vector.broadcast %71 : vector<8x1xf32> to vector<8x96xf32>
    %76 = vector.broadcast %73 : vector<1x96xf32> to vector<8x96xf32>
    %77 = arith.addf %75, %76 : vector<8x96xf32>
    %cst_24 = arith.constant 2.000000e+00 : f32
    %78 = vector.broadcast %cst_24 : f32 to vector<8x96xf32>
    %79 = arith.mulf %78, %74 : vector<8x96xf32>
    %80 = arith.subf %77, %79 : vector<8x96xf32>
    %cst_25 = arith.constant 9.99999996E-13 : f32
    %81 = vector.broadcast %cst_25 : f32 to vector<8x96xf32>
    %82 = arith.maximumf %80, %81 : vector<8x96xf32>
    %83 = math.sqrt %82 : vector<8x96xf32>
    %84 = arith.mulf %83, %20 : vector<8x96xf32>
    %85 = vector.shape_cast %84 : vector<8x96xf32> to vector<1x8x96xf32>
    %cst_26 = arith.constant dense<0.000000e+00> : vector<1xf32>
    %86 = vector.multi_reduction <add>, %85, %cst_26 [1, 2] : vector<1x8x96xf32> to vector<1xf32>
    %87 = vector.shape_cast %86 : vector<1xf32> to vector<1x1x1xf32>
    %88 = vector.extract %87[0, 0, 0] : f32 from vector<1x1x1xf32>
    %cst_27 = arith.constant 0.010416667 : f32
    %89 = arith.mulf %88, %cst_27 : f32
    %cst_28 = arith.constant 6.000000e-01 : f32
    %90 = vector.broadcast %cst_28 : f32 to vector<8x96xf32>
    %91 = arith.subf %90, %83 : vector<8x96xf32>
    %cst_29 = arith.constant 0.000000e+00 : f32
    %92 = vector.broadcast %cst_29 : f32 to vector<8x96xf32>
    %93 = arith.maximumf %91, %92 : vector<8x96xf32>
    %cst_30 = arith.constant 1.000000e+00 : f32
    %94 = vector.broadcast %cst_30 : f32 to vector<8x96xf32>
    %95 = arith.subf %94, %20 : vector<8x96xf32>
    %96 = arith.mulf %93, %95 : vector<8x96xf32>
    %97 = vector.shape_cast %96 : vector<8x96xf32> to vector<1x8x96xf32>
    %cst_31 = arith.constant dense<0.000000e+00> : vector<1xf32>
    %98 = vector.multi_reduction <add>, %97, %cst_31 [1, 2] : vector<1x8x96xf32> to vector<1xf32>
    %99 = vector.shape_cast %98 : vector<1xf32> to vector<1x1x1xf32>
    %100 = vector.extract %99[0, 0, 0] : f32 from vector<1x1x1xf32>
    %cst_32 = arith.constant 0.00148809527 : f32
    %101 = arith.mulf %100, %cst_32 : f32
    %102 = arith.addf %89, %101 : f32
    %103 = vector.broadcast %102 : f32 to vector<1x128xf32>
    %104 = arith.index_cast %c1_i32 : i32 to index
    %c0_33 = arith.constant 0 : index
    %105 = vector.load %arg2[%104, %c0_33] : memref<8x128xf32, #tpu.memory_space<vmem>>, vector<1x128xf32>
    tpu.vector_store %arg2[%104, %c0_33], %103 {strides = array<i32>} : memref<8x128xf32, #tpu.memory_space<vmem>>, vector<1x128xf32>,
    %c2_i32 = arith.constant 2 : i32
    %106 = arith.index_cast %c2_i32 : i32 to index
    %c0_34 = arith.constant 0 : index
    %c0_35 = arith.constant 0 : index
    %107 = vector.load %arg1[%106, %c0_34, %c0_35] : memref<8x96x128xf32, #tpu.memory_space<vmem>>, vector<1x96x128xf32>
    %108 = vector.shape_cast %107 : vector<1x96x128xf32> to vector<96x128xf32>
    %cst_36 = arith.constant dense<0.000000e+00> : vector<8x128xf32>
    %109 = tpu.matmul %22, %108, %cst_36 {dimension_numbers = #tpu.dot_dimension_numbers<[1], [0], [0], [1], [0, 0, 1, 1], [], []>} : vector<8x96xf32>, vector<96x128xf32>, vector<8x128xf32> -> vector<8x128xf32>
    %110 = arith.mulf %109, %109 : vector<8x128xf32>
    %cst_37 = arith.constant dense<0.000000e+00> : vector<8xf32>
    %111 = vector.multi_reduction <add>, %110, %cst_37 [1] : vector<8x128xf32> to vector<8xf32>
    %112 = vector.shape_cast %111 : vector<8xf32> to vector<8x1xf32>
    %113 = arith.mulf %108, %108 : vector<96x128xf32>
    %cst_38 = arith.constant dense<0.000000e+00> : vector<1x96xf32>
    %114 = tpu.matmul %23, %113, %cst_38 {dimension_numbers = #tpu.dot_dimension_numbers<[1], [1], [0], [0], [0, 0, 1, 0], [], []>} : vector<1x128xf32>, vector<96x128xf32>, vector<1x96xf32> -> vector<1x96xf32>
    %cst_39 = arith.constant dense<0.000000e+00> : vector<8x96xf32>
    %115 = tpu.matmul %109, %108, %cst_39 {dimension_numbers = #tpu.dot_dimension_numbers<[1], [1], [0], [0], [0, 0, 1, 0], [], []>} : vector<8x128xf32>, vector<96x128xf32>, vector<8x96xf32> -> vector<8x96xf32>
    %116 = vector.broadcast %112 : vector<8x1xf32> to vector<8x96xf32>
    %117 = vector.broadcast %114 : vector<1x96xf32> to vector<8x96xf32>
    %118 = arith.addf %116, %117 : vector<8x96xf32>
    %cst_40 = arith.constant 2.000000e+00 : f32
    %119 = vector.broadcast %cst_40 : f32 to vector<8x96xf32>
    %120 = arith.mulf %119, %115 : vector<8x96xf32>
    %121 = arith.subf %118, %120 : vector<8x96xf32>
    %cst_41 = arith.constant 9.99999996E-13 : f32
    %122 = vector.broadcast %cst_41 : f32 to vector<8x96xf32>
    %123 = arith.maximumf %121, %122 : vector<8x96xf32>
    %124 = math.sqrt %123 : vector<8x96xf32>
    %125 = arith.mulf %124, %20 : vector<8x96xf32>
    %126 = vector.shape_cast %125 : vector<8x96xf32> to vector<1x8x96xf32>
    %cst_42 = arith.constant dense<0.000000e+00> : vector<1xf32>
    %127 = vector.multi_reduction <add>, %126, %cst_42 [1, 2] : vector<1x8x96xf32> to vector<1xf32>
    %128 = vector.shape_cast %127 : vector<1xf32> to vector<1x1x1xf32>
    %129 = vector.extract %128[0, 0, 0] : f32 from vector<1x1x1xf32>
    %cst_43 = arith.constant 0.010416667 : f32
    %130 = arith.mulf %129, %cst_43 : f32
    %cst_44 = arith.constant 6.000000e-01 : f32
    %131 = vector.broadcast %cst_44 : f32 to vector<8x96xf32>
    %132 = arith.subf %131, %124 : vector<8x96xf32>
    %cst_45 = arith.constant 0.000000e+00 : f32
    %133 = vector.broadcast %cst_45 : f32 to vector<8x96xf32>
    %134 = arith.maximumf %132, %133 : vector<8x96xf32>
    %cst_46 = arith.constant 1.000000e+00 : f32
    %135 = vector.broadcast %cst_46 : f32 to vector<8x96xf32>
    %136 = arith.subf %135, %20 : vector<8x96xf32>
    %137 = arith.mulf %134, %136 : vector<8x96xf32>
    %138 = vector.shape_cast %137 : vector<8x96xf32> to vector<1x8x96xf32>
    %cst_47 = arith.constant dense<0.000000e+00> : vector<1xf32>
    %139 = vector.multi_reduction <add>, %138, %cst_47 [1, 2] : vector<1x8x96xf32> to vector<1xf32>
    %140 = vector.shape_cast %139 : vector<1xf32> to vector<1x1x1xf32>
    %141 = vector.extract %140[0, 0, 0] : f32 from vector<1x1x1xf32>
    %cst_48 = arith.constant 0.00148809527 : f32
    %142 = arith.mulf %141, %cst_48 : f32
    %143 = arith.addf %130, %142 : f32
    %144 = vector.broadcast %143 : f32 to vector<1x128xf32>
    %145 = arith.index_cast %c2_i32 : i32 to index
    %c0_49 = arith.constant 0 : index
    %146 = vector.load %arg2[%145, %c0_49] : memref<8x128xf32, #tpu.memory_space<vmem>>, vector<1x128xf32>
    tpu.vector_store %arg2[%145, %c0_49], %144 {strides = array<i32>} : memref<8x128xf32, #tpu.memory_space<vmem>>, vector<1x128xf32>,
    %c3_i32 = arith.constant 3 : i32
    %147 = arith.index_cast %c3_i32 : i32 to index
    %c0_50 = arith.constant 0 : index
    %c0_51 = arith.constant 0 : index
    %148 = vector.load %arg1[%147, %c0_50, %c0_51] : memref<8x96x128xf32, #tpu.memory_space<vmem>>, vector<1x96x128xf32>
    %149 = vector.shape_cast %148 : vector<1x96x128xf32> to vector<96x128xf32>
    %cst_52 = arith.constant dense<0.000000e+00> : vector<8x128xf32>
    %150 = tpu.matmul %22, %149, %cst_52 {dimension_numbers = #tpu.dot_dimension_numbers<[1], [0], [0], [1], [0, 0, 1, 1], [], []>} : vector<8x96xf32>, vector<96x128xf32>, vector<8x128xf32> -> vector<8x128xf32>
    %151 = arith.mulf %150, %150 : vector<8x128xf32>
    %cst_53 = arith.constant dense<0.000000e+00> : vector<8xf32>
    %152 = vector.multi_reduction <add>, %151, %cst_53 [1] : vector<8x128xf32> to vector<8xf32>
    %153 = vector.shape_cast %152 : vector<8xf32> to vector<8x1xf32>
    %154 = arith.mulf %149, %149 : vector<96x128xf32>
    %cst_54 = arith.constant dense<0.000000e+00> : vector<1x96xf32>
    %155 = tpu.matmul %23, %154, %cst_54 {dimension_numbers = #tpu.dot_dimension_numbers<[1], [1], [0], [0], [0, 0, 1, 0], [], []>} : vector<1x128xf32>, vector<96x128xf32>, vector<1x96xf32> -> vector<1x96xf32>
    %cst_55 = arith.constant dense<0.000000e+00> : vector<8x96xf32>
    %156 = tpu.matmul %150, %149, %cst_55 {dimension_numbers = #tpu.dot_dimension_numbers<[1], [1], [0], [0], [0, 0, 1, 0], [], []>} : vector<8x128xf32>, vector<96x128xf32>, vector<8x96xf32> -> vector<8x96xf32>
    %157 = vector.broadcast %153 : vector<8x1xf32> to vector<8x96xf32>
    %158 = vector.broadcast %155 : vector<1x96xf32> to vector<8x96xf32>
    %159 = arith.addf %157, %158 : vector<8x96xf32>
    %cst_56 = arith.constant 2.000000e+00 : f32
    %160 = vector.broadcast %cst_56 : f32 to vector<8x96xf32>
    %161 = arith.mulf %160, %156 : vector<8x96xf32>
    %162 = arith.subf %159, %161 : vector<8x96xf32>
    %cst_57 = arith.constant 9.99999996E-13 : f32
    %163 = vector.broadcast %cst_57 : f32 to vector<8x96xf32>
    %164 = arith.maximumf %162, %163 : vector<8x96xf32>
    %165 = math.sqrt %164 : vector<8x96xf32>
    %166 = arith.mulf %165, %20 : vector<8x96xf32>
    %167 = vector.shape_cast %166 : vector<8x96xf32> to vector<1x8x96xf32>
    %cst_58 = arith.constant dense<0.000000e+00> : vector<1xf32>
    %168 = vector.multi_reduction <add>, %167, %cst_58 [1, 2] : vector<1x8x96xf32> to vector<1xf32>
    %169 = vector.shape_cast %168 : vector<1xf32> to vector<1x1x1xf32>
    %170 = vector.extract %169[0, 0, 0] : f32 from vector<1x1x1xf32>
    %cst_59 = arith.constant 0.010416667 : f32
    %171 = arith.mulf %170, %cst_59 : f32
    %cst_60 = arith.constant 6.000000e-01 : f32
    %172 = vector.broadcast %cst_60 : f32 to vector<8x96xf32>
    %173 = arith.subf %172, %165 : vector<8x96xf32>
    %cst_61 = arith.constant 0.000000e+00 : f32
    %174 = vector.broadcast %cst_61 : f32 to vector<8x96xf32>
    %175 = arith.maximumf %173, %174 : vector<8x96xf32>
    %cst_62 = arith.constant 1.000000e+00 : f32
    %176 = vector.broadcast %cst_62 : f32 to vector<8x96xf32>
    %177 = arith.subf %176, %20 : vector<8x96xf32>
    %178 = arith.mulf %175, %177 : vector<8x96xf32>
    %179 = vector.shape_cast %178 : vector<8x96xf32> to vector<1x8x96xf32>
    %cst_63 = arith.constant dense<0.000000e+00> : vector<1xf32>
    %180 = vector.multi_reduction <add>, %179, %cst_63 [1, 2] : vector<1x8x96xf32> to vector<1xf32>
    %181 = vector.shape_cast %180 : vector<1xf32> to vector<1x1x1xf32>
    %182 = vector.extract %181[0, 0, 0] : f32 from vector<1x1x1xf32>
    %cst_64 = arith.constant 0.00148809527 : f32
    %183 = arith.mulf %182, %cst_64 : f32
    %184 = arith.addf %171, %183 : f32
    %185 = vector.broadcast %184 : f32 to vector<1x128xf32>
    %186 = arith.index_cast %c3_i32 : i32 to index
    %c0_65 = arith.constant 0 : index
    %187 = vector.load %arg2[%186, %c0_65] : memref<8x128xf32, #tpu.memory_space<vmem>>, vector<1x128xf32>
    tpu.vector_store %arg2[%186, %c0_65], %185 {strides = array<i32>} : memref<8x128xf32, #tpu.memory_space<vmem>>, vector<1x128xf32>,
    %c4_i32_66 = arith.constant 4 : i32
    %188 = arith.index_cast %c4_i32_66 : i32 to index
    %c0_67 = arith.constant 0 : index
    %c0_68 = arith.constant 0 : index
    %189 = vector.load %arg1[%188, %c0_67, %c0_68] : memref<8x96x128xf32, #tpu.memory_space<vmem>>, vector<1x96x128xf32>
    %190 = vector.shape_cast %189 : vector<1x96x128xf32> to vector<96x128xf32>
    %cst_69 = arith.constant dense<0.000000e+00> : vector<8x128xf32>
    %191 = tpu.matmul %22, %190, %cst_69 {dimension_numbers = #tpu.dot_dimension_numbers<[1], [0], [0], [1], [0, 0, 1, 1], [], []>} : vector<8x96xf32>, vector<96x128xf32>, vector<8x128xf32> -> vector<8x128xf32>
    %192 = arith.mulf %191, %191 : vector<8x128xf32>
    %cst_70 = arith.constant dense<0.000000e+00> : vector<8xf32>
    %193 = vector.multi_reduction <add>, %192, %cst_70 [1] : vector<8x128xf32> to vector<8xf32>
    %194 = vector.shape_cast %193 : vector<8xf32> to vector<8x1xf32>
    %195 = arith.mulf %190, %190 : vector<96x128xf32>
    %cst_71 = arith.constant dense<0.000000e+00> : vector<1x96xf32>
    %196 = tpu.matmul %23, %195, %cst_71 {dimension_numbers = #tpu.dot_dimension_numbers<[1], [1], [0], [0], [0, 0, 1, 0], [], []>} : vector<1x128xf32>, vector<96x128xf32>, vector<1x96xf32> -> vector<1x96xf32>
    %cst_72 = arith.constant dense<0.000000e+00> : vector<8x96xf32>
    %197 = tpu.matmul %191, %190, %cst_72 {dimension_numbers = #tpu.dot_dimension_numbers<[1], [1], [0], [0], [0, 0, 1, 0], [], []>} : vector<8x128xf32>, vector<96x128xf32>, vector<8x96xf32> -> vector<8x96xf32>
    %198 = vector.broadcast %194 : vector<8x1xf32> to vector<8x96xf32>
    %199 = vector.broadcast %196 : vector<1x96xf32> to vector<8x96xf32>
    %200 = arith.addf %198, %199 : vector<8x96xf32>
    %cst_73 = arith.constant 2.000000e+00 : f32
    %201 = vector.broadcast %cst_73 : f32 to vector<8x96xf32>
    %202 = arith.mulf %201, %197 : vector<8x96xf32>
    %203 = arith.subf %200, %202 : vector<8x96xf32>
    %cst_74 = arith.constant 9.99999996E-13 : f32
    %204 = vector.broadcast %cst_74 : f32 to vector<8x96xf32>
    %205 = arith.maximumf %203, %204 : vector<8x96xf32>
    %206 = math.sqrt %205 : vector<8x96xf32>
    %207 = arith.mulf %206, %20 : vector<8x96xf32>
    %208 = vector.shape_cast %207 : vector<8x96xf32> to vector<1x8x96xf32>
    %cst_75 = arith.constant dense<0.000000e+00> : vector<1xf32>
    %209 = vector.multi_reduction <add>, %208, %cst_75 [1, 2] : vector<1x8x96xf32> to vector<1xf32>
    %210 = vector.shape_cast %209 : vector<1xf32> to vector<1x1x1xf32>
    %211 = vector.extract %210[0, 0, 0] : f32 from vector<1x1x1xf32>
    %cst_76 = arith.constant 0.010416667 : f32
    %212 = arith.mulf %211, %cst_76 : f32
    %cst_77 = arith.constant 6.000000e-01 : f32
    %213 = vector.broadcast %cst_77 : f32 to vector<8x96xf32>
    %214 = arith.subf %213, %206 : vector<8x96xf32>
    %cst_78 = arith.constant 0.000000e+00 : f32
    %215 = vector.broadcast %cst_78 : f32 to vector<8x96xf32>
    %216 = arith.maximumf %214, %215 : vector<8x96xf32>
    %cst_79 = arith.constant 1.000000e+00 : f32
    %217 = vector.broadcast %cst_79 : f32 to vector<8x96xf32>
    %218 = arith.subf %217, %20 : vector<8x96xf32>
    %219 = arith.mulf %216, %218 : vector<8x96xf32>
    %220 = vector.shape_cast %219 : vector<8x96xf32> to vector<1x8x96xf32>
    %cst_80 = arith.constant dense<0.000000e+00> : vector<1xf32>
    %221 = vector.multi_reduction <add>, %220, %cst_80 [1, 2] : vector<1x8x96xf32> to vector<1xf32>
    %222 = vector.shape_cast %221 : vector<1xf32> to vector<1x1x1xf32>
    %223 = vector.extract %222[0, 0, 0] : f32 from vector<1x1x1xf32>
    %cst_81 = arith.constant 0.00148809527 : f32
    %224 = arith.mulf %223, %cst_81 : f32
    %225 = arith.addf %212, %224 : f32
    %226 = vector.broadcast %225 : f32 to vector<1x128xf32>
    %227 = arith.index_cast %c4_i32_66 : i32 to index
    %c0_82 = arith.constant 0 : index
    %228 = vector.load %arg2[%227, %c0_82] : memref<8x128xf32, #tpu.memory_space<vmem>>, vector<1x128xf32>
    tpu.vector_store %arg2[%227, %c0_82], %226 {strides = array<i32>} : memref<8x128xf32, #tpu.memory_space<vmem>>, vector<1x128xf32>,
    %c5_i32 = arith.constant 5 : i32
    %229 = arith.index_cast %c5_i32 : i32 to index
    %c0_83 = arith.constant 0 : index
    %c0_84 = arith.constant 0 : index
    %230 = vector.load %arg1[%229, %c0_83, %c0_84] : memref<8x96x128xf32, #tpu.memory_space<vmem>>, vector<1x96x128xf32>
    %231 = vector.shape_cast %230 : vector<1x96x128xf32> to vector<96x128xf32>
    %cst_85 = arith.constant dense<0.000000e+00> : vector<8x128xf32>
    %232 = tpu.matmul %22, %231, %cst_85 {dimension_numbers = #tpu.dot_dimension_numbers<[1], [0], [0], [1], [0, 0, 1, 1], [], []>} : vector<8x96xf32>, vector<96x128xf32>, vector<8x128xf32> -> vector<8x128xf32>
    %233 = arith.mulf %232, %232 : vector<8x128xf32>
    %cst_86 = arith.constant dense<0.000000e+00> : vector<8xf32>
    %234 = vector.multi_reduction <add>, %233, %cst_86 [1] : vector<8x128xf32> to vector<8xf32>
    %235 = vector.shape_cast %234 : vector<8xf32> to vector<8x1xf32>
    %236 = arith.mulf %231, %231 : vector<96x128xf32>
    %cst_87 = arith.constant dense<0.000000e+00> : vector<1x96xf32>
    %237 = tpu.matmul %23, %236, %cst_87 {dimension_numbers = #tpu.dot_dimension_numbers<[1], [1], [0], [0], [0, 0, 1, 0], [], []>} : vector<1x128xf32>, vector<96x128xf32>, vector<1x96xf32> -> vector<1x96xf32>
    %cst_88 = arith.constant dense<0.000000e+00> : vector<8x96xf32>
    %238 = tpu.matmul %232, %231, %cst_88 {dimension_numbers = #tpu.dot_dimension_numbers<[1], [1], [0], [0], [0, 0, 1, 0], [], []>} : vector<8x128xf32>, vector<96x128xf32>, vector<8x96xf32> -> vector<8x96xf32>
    %239 = vector.broadcast %235 : vector<8x1xf32> to vector<8x96xf32>
    %240 = vector.broadcast %237 : vector<1x96xf32> to vector<8x96xf32>
    %241 = arith.addf %239, %240 : vector<8x96xf32>
    %cst_89 = arith.constant 2.000000e+00 : f32
    %242 = vector.broadcast %cst_89 : f32 to vector<8x96xf32>
    %243 = arith.mulf %242, %238 : vector<8x96xf32>
    %244 = arith.subf %241, %243 : vector<8x96xf32>
    %cst_90 = arith.constant 9.99999996E-13 : f32
    %245 = vector.broadcast %cst_90 : f32 to vector<8x96xf32>
    %246 = arith.maximumf %244, %245 : vector<8x96xf32>
    %247 = math.sqrt %246 : vector<8x96xf32>
    %248 = arith.mulf %247, %20 : vector<8x96xf32>
    %249 = vector.shape_cast %248 : vector<8x96xf32> to vector<1x8x96xf32>
    %cst_91 = arith.constant dense<0.000000e+00> : vector<1xf32>
    %250 = vector.multi_reduction <add>, %249, %cst_91 [1, 2] : vector<1x8x96xf32> to vector<1xf32>
    %251 = vector.shape_cast %250 : vector<1xf32> to vector<1x1x1xf32>
    %252 = vector.extract %251[0, 0, 0] : f32 from vector<1x1x1xf32>
    %cst_92 = arith.constant 0.010416667 : f32
    %253 = arith.mulf %252, %cst_92 : f32
    %cst_93 = arith.constant 6.000000e-01 : f32
    %254 = vector.broadcast %cst_93 : f32 to vector<8x96xf32>
    %255 = arith.subf %254, %247 : vector<8x96xf32>
    %cst_94 = arith.constant 0.000000e+00 : f32
    %256 = vector.broadcast %cst_94 : f32 to vector<8x96xf32>
    %257 = arith.maximumf %255, %256 : vector<8x96xf32>
    %cst_95 = arith.constant 1.000000e+00 : f32
    %258 = vector.broadcast %cst_95 : f32 to vector<8x96xf32>
    %259 = arith.subf %258, %20 : vector<8x96xf32>
    %260 = arith.mulf %257, %259 : vector<8x96xf32>
    %261 = vector.shape_cast %260 : vector<8x96xf32> to vector<1x8x96xf32>
    %cst_96 = arith.constant dense<0.000000e+00> : vector<1xf32>
    %262 = vector.multi_reduction <add>, %261, %cst_96 [1, 2] : vector<1x8x96xf32> to vector<1xf32>
    %263 = vector.shape_cast %262 : vector<1xf32> to vector<1x1x1xf32>
    %264 = vector.extract %263[0, 0, 0] : f32 from vector<1x1x1xf32>
    %cst_97 = arith.constant 0.00148809527 : f32
    %265 = arith.mulf %264, %cst_97 : f32
    %266 = arith.addf %253, %265 : f32
    %267 = vector.broadcast %266 : f32 to vector<1x128xf32>
    %268 = arith.index_cast %c5_i32 : i32 to index
    %c0_98 = arith.constant 0 : index
    %269 = vector.load %arg2[%268, %c0_98] : memref<8x128xf32, #tpu.memory_space<vmem>>, vector<1x128xf32>
    tpu.vector_store %arg2[%268, %c0_98], %267 {strides = array<i32>} : memref<8x128xf32, #tpu.memory_space<vmem>>, vector<1x128xf32>,
    %c6_i32 = arith.constant 6 : i32
    %270 = arith.index_cast %c6_i32 : i32 to index
    %c0_99 = arith.constant 0 : index
    %c0_100 = arith.constant 0 : index
    %271 = vector.load %arg1[%270, %c0_99, %c0_100] : memref<8x96x128xf32, #tpu.memory_space<vmem>>, vector<1x96x128xf32>
    %272 = vector.shape_cast %271 : vector<1x96x128xf32> to vector<96x128xf32>
    %cst_101 = arith.constant dense<0.000000e+00> : vector<8x128xf32>
    %273 = tpu.matmul %22, %272, %cst_101 {dimension_numbers = #tpu.dot_dimension_numbers<[1], [0], [0], [1], [0, 0, 1, 1], [], []>} : vector<8x96xf32>, vector<96x128xf32>, vector<8x128xf32> -> vector<8x128xf32>
    %274 = arith.mulf %273, %273 : vector<8x128xf32>
    %cst_102 = arith.constant dense<0.000000e+00> : vector<8xf32>
    %275 = vector.multi_reduction <add>, %274, %cst_102 [1] : vector<8x128xf32> to vector<8xf32>
    %276 = vector.shape_cast %275 : vector<8xf32> to vector<8x1xf32>
    %277 = arith.mulf %272, %272 : vector<96x128xf32>
    %cst_103 = arith.constant dense<0.000000e+00> : vector<1x96xf32>
    %278 = tpu.matmul %23, %277, %cst_103 {dimension_numbers = #tpu.dot_dimension_numbers<[1], [1], [0], [0], [0, 0, 1, 0], [], []>} : vector<1x128xf32>, vector<96x128xf32>, vector<1x96xf32> -> vector<1x96xf32>
    %cst_104 = arith.constant dense<0.000000e+00> : vector<8x96xf32>
    %279 = tpu.matmul %273, %272, %cst_104 {dimension_numbers = #tpu.dot_dimension_numbers<[1], [1], [0], [0], [0, 0, 1, 0], [], []>} : vector<8x128xf32>, vector<96x128xf32>, vector<8x96xf32> -> vector<8x96xf32>
    %280 = vector.broadcast %276 : vector<8x1xf32> to vector<8x96xf32>
    %281 = vector.broadcast %278 : vector<1x96xf32> to vector<8x96xf32>
    %282 = arith.addf %280, %281 : vector<8x96xf32>
    %cst_105 = arith.constant 2.000000e+00 : f32
    %283 = vector.broadcast %cst_105 : f32 to vector<8x96xf32>
    %284 = arith.mulf %283, %279 : vector<8x96xf32>
    %285 = arith.subf %282, %284 : vector<8x96xf32>
    %cst_106 = arith.constant 9.99999996E-13 : f32
    %286 = vector.broadcast %cst_106 : f32 to vector<8x96xf32>
    %287 = arith.maximumf %285, %286 : vector<8x96xf32>
    %288 = math.sqrt %287 : vector<8x96xf32>
    %289 = arith.mulf %288, %20 : vector<8x96xf32>
    %290 = vector.shape_cast %289 : vector<8x96xf32> to vector<1x8x96xf32>
    %cst_107 = arith.constant dense<0.000000e+00> : vector<1xf32>
    %291 = vector.multi_reduction <add>, %290, %cst_107 [1, 2] : vector<1x8x96xf32> to vector<1xf32>
    %292 = vector.shape_cast %291 : vector<1xf32> to vector<1x1x1xf32>
    %293 = vector.extract %292[0, 0, 0] : f32 from vector<1x1x1xf32>
    %cst_108 = arith.constant 0.010416667 : f32
    %294 = arith.mulf %293, %cst_108 : f32
    %cst_109 = arith.constant 6.000000e-01 : f32
    %295 = vector.broadcast %cst_109 : f32 to vector<8x96xf32>
    %296 = arith.subf %295, %288 : vector<8x96xf32>
    %cst_110 = arith.constant 0.000000e+00 : f32
    %297 = vector.broadcast %cst_110 : f32 to vector<8x96xf32>
    %298 = arith.maximumf %296, %297 : vector<8x96xf32>
    %cst_111 = arith.constant 1.000000e+00 : f32
    %299 = vector.broadcast %cst_111 : f32 to vector<8x96xf32>
    %300 = arith.subf %299, %20 : vector<8x96xf32>
    %301 = arith.mulf %298, %300 : vector<8x96xf32>
    %302 = vector.shape_cast %301 : vector<8x96xf32> to vector<1x8x96xf32>
    %cst_112 = arith.constant dense<0.000000e+00> : vector<1xf32>
    %303 = vector.multi_reduction <add>, %302, %cst_112 [1, 2] : vector<1x8x96xf32> to vector<1xf32>
    %304 = vector.shape_cast %303 : vector<1xf32> to vector<1x1x1xf32>
    %305 = vector.extract %304[0, 0, 0] : f32 from vector<1x1x1xf32>
    %cst_113 = arith.constant 0.00148809527 : f32
    %306 = arith.mulf %305, %cst_113 : f32
    %307 = arith.addf %294, %306 : f32
    %308 = vector.broadcast %307 : f32 to vector<1x128xf32>
    %309 = arith.index_cast %c6_i32 : i32 to index
    %c0_114 = arith.constant 0 : index
    %310 = vector.load %arg2[%309, %c0_114] : memref<8x128xf32, #tpu.memory_space<vmem>>, vector<1x128xf32>
    tpu.vector_store %arg2[%309, %c0_114], %308 {strides = array<i32>} : memref<8x128xf32, #tpu.memory_space<vmem>>, vector<1x128xf32>,
    %c7_i32 = arith.constant 7 : i32
    %311 = arith.index_cast %c7_i32 : i32 to index
    %c0_115 = arith.constant 0 : index
    %c0_116 = arith.constant 0 : index
    %312 = vector.load %arg1[%311, %c0_115, %c0_116] : memref<8x96x128xf32, #tpu.memory_space<vmem>>, vector<1x96x128xf32>
    %313 = vector.shape_cast %312 : vector<1x96x128xf32> to vector<96x128xf32>
    %cst_117 = arith.constant dense<0.000000e+00> : vector<8x128xf32>
    %314 = tpu.matmul %22, %313, %cst_117 {dimension_numbers = #tpu.dot_dimension_numbers<[1], [0], [0], [1], [0, 0, 1, 1], [], []>} : vector<8x96xf32>, vector<96x128xf32>, vector<8x128xf32> -> vector<8x128xf32>
    %315 = arith.mulf %314, %314 : vector<8x128xf32>
    %cst_118 = arith.constant dense<0.000000e+00> : vector<8xf32>
    %316 = vector.multi_reduction <add>, %315, %cst_118 [1] : vector<8x128xf32> to vector<8xf32>
    %317 = vector.shape_cast %316 : vector<8xf32> to vector<8x1xf32>
    %318 = arith.mulf %313, %313 : vector<96x128xf32>
    %cst_119 = arith.constant dense<0.000000e+00> : vector<1x96xf32>
    %319 = tpu.matmul %23, %318, %cst_119 {dimension_numbers = #tpu.dot_dimension_numbers<[1], [1], [0], [0], [0, 0, 1, 0], [], []>} : vector<1x128xf32>, vector<96x128xf32>, vector<1x96xf32> -> vector<1x96xf32>
    %cst_120 = arith.constant dense<0.000000e+00> : vector<8x96xf32>
    %320 = tpu.matmul %314, %313, %cst_120 {dimension_numbers = #tpu.dot_dimension_numbers<[1], [1], [0], [0], [0, 0, 1, 0], [], []>} : vector<8x128xf32>, vector<96x128xf32>, vector<8x96xf32> -> vector<8x96xf32>
    %321 = vector.broadcast %317 : vector<8x1xf32> to vector<8x96xf32>
    %322 = vector.broadcast %319 : vector<1x96xf32> to vector<8x96xf32>
    %323 = arith.addf %321, %322 : vector<8x96xf32>
    %cst_121 = arith.constant 2.000000e+00 : f32
    %324 = vector.broadcast %cst_121 : f32 to vector<8x96xf32>
    %325 = arith.mulf %324, %320 : vector<8x96xf32>
    %326 = arith.subf %323, %325 : vector<8x96xf32>
    %cst_122 = arith.constant 9.99999996E-13 : f32
    %327 = vector.broadcast %cst_122 : f32 to vector<8x96xf32>
    %328 = arith.maximumf %326, %327 : vector<8x96xf32>
    %329 = math.sqrt %328 : vector<8x96xf32>
    %330 = arith.mulf %329, %20 : vector<8x96xf32>
    %331 = vector.shape_cast %330 : vector<8x96xf32> to vector<1x8x96xf32>
    %cst_123 = arith.constant dense<0.000000e+00> : vector<1xf32>
    %332 = vector.multi_reduction <add>, %331, %cst_123 [1, 2] : vector<1x8x96xf32> to vector<1xf32>
    %333 = vector.shape_cast %332 : vector<1xf32> to vector<1x1x1xf32>
    %334 = vector.extract %333[0, 0, 0] : f32 from vector<1x1x1xf32>
    %cst_124 = arith.constant 0.010416667 : f32
    %335 = arith.mulf %334, %cst_124 : f32
    %cst_125 = arith.constant 6.000000e-01 : f32
    %336 = vector.broadcast %cst_125 : f32 to vector<8x96xf32>
    %337 = arith.subf %336, %329 : vector<8x96xf32>
    %cst_126 = arith.constant 0.000000e+00 : f32
    %338 = vector.broadcast %cst_126 : f32 to vector<8x96xf32>
    %339 = arith.maximumf %337, %338 : vector<8x96xf32>
    %cst_127 = arith.constant 1.000000e+00 : f32
    %340 = vector.broadcast %cst_127 : f32 to vector<8x96xf32>
    %341 = arith.subf %340, %20 : vector<8x96xf32>
    %342 = arith.mulf %339, %341 : vector<8x96xf32>
    %343 = vector.shape_cast %342 : vector<8x96xf32> to vector<1x8x96xf32>
    %cst_128 = arith.constant dense<0.000000e+00> : vector<1xf32>
    %344 = vector.multi_reduction <add>, %343, %cst_128 [1, 2] : vector<1x8x96xf32> to vector<1xf32>
    %345 = vector.shape_cast %344 : vector<1xf32> to vector<1x1x1xf32>
    %346 = vector.extract %345[0, 0, 0] : f32 from vector<1x1x1xf32>
    %cst_129 = arith.constant 0.00148809527 : f32
    %347 = arith.mulf %346, %cst_129 : f32
    %348 = arith.addf %335, %347 : f32
    %349 = vector.broadcast %348 : f32 to vector<1x128xf32>
    %350 = arith.index_cast %c7_i32 : i32 to index
    %c0_130 = arith.constant 0 : index
    %351 = vector.load %arg2[%350, %c0_130] : memref<8x128xf32, #tpu.memory_space<vmem>>, vector<1x128xf32>
    tpu.vector_store %arg2[%350, %c0_130], %349 {strides = array<i32>} : memref<8x128xf32, #tpu.memory_space<vmem>>, vector<1x128xf32>,
    %c8_i32 = arith.constant 8 : i32
    return
  }
  func.func @transform_0(%arg0: i32) -> (i32, i32, i32) {
    %c0_i32 = arith.constant 0 : i32
    %c0_i32_0 = arith.constant 0 : i32
    %c0_i32_1 = arith.constant 0 : i32
    return %arg0, %c0_i32, %c0_i32_0 : i32, i32, i32
  }
  func.func @transform_1(%arg0: i32) -> (i32, i32) {
    %c0_i32 = arith.constant 0 : i32
    %c0_i32_0 = arith.constant 0 : i32
    return %arg0, %c0_i32 : i32, i32
  }
}

</mosaic_0001>

<llo_original>
// kernel: tpu_custom_call.1
$region0: #{tpu_custom_call.1}
  #allocation0 [shape = 'u32[]', space=smem, size = 0x4, offset = 0x4, fixed_abs, tag = 'smem constant byte address 0x4 - core index']
  #allocation1 [shape = 'u32[144,128]{1,0:T(1,128)}', space=vmem, size = 0x12000, scoped, tag = 'internal scratch']
  %s0 = inlined_call_operand.hbm [shape: f32[8,96,128], index: 0, kind: input, shape index: {}]
  %s1 = inlined_call_operand.hbm [shape: f32[8,128], index: 1, kind: output, shape index: {}]
  %s2 = sld [smem:[#allocation0]]
  $region18: #{tpu_custom_call.1} parent=0
    _
  %s4 = ssub.s32 1, %s2
  %s5 = scalar_select 0, %s4, %s2
  $region1: #{tpu_custom_call.1} parent=0
    #allocation2 [shape = 'u8[393216]{0}', space=vmem, size = 0x60000, scoped, tag = 'input window, operand 0, single buffered']
    #allocation3 [shape = 's32[1]{0}', space=sflag, size = 0x4, scoped, tag = 'scoped memory for tpu_custom_call.1']
    #allocation4 [shape = 's32[1]{0}', space=sflag, size = 0x4, scoped, tag = 'scoped memory for tpu_custom_call.1']
    #allocation5 [shape = 'u8[4096]{0}', space=vmem, size = 0x1000, scoped, tag = 'output window, operand 0, single buffered']
    %6 = vsyncpa [#allocation3], 0
    %7 = vsyncpa [#allocation4], 0
    // Predicated region
    $region2: #{tpu_custom_call.1} parent=1 // pred_check
      _
    $region3: #{tpu_custom_call.1} parent=1 // pred_check_branch
      %9 = sbr.rel (0) target = $region5
    $region4: #{tpu_custom_call.1} parent=1 // pred_region
      %s11 = ssub.s32 12288, 12288
      %12 = vsyncadd [#allocation3], %s11
      %s13 = sshll.u32 [#allocation2], 4
      %s14 = int_to_ptr.vmem [resolvable:$true] %s13
      %19 = dma.hbm_to_vmem [thread:$0]  %s0, 12288, %s14, [#allocation3], 128, 128, 8
    $region5: #{tpu_custom_call.1} parent=1 // pred_fallthru
      _
    // Predicated region
    $region6: #{tpu_custom_call.1} parent=1 // pred_check
      _
    $region7: #{tpu_custom_call.1} parent=1 // pred_check_branch
      %21 = sbr.rel (0) target = $region9
    $region8: #{tpu_custom_call.1} parent=1 // pred_region
      %22 = dma.done [#allocation3], 12288
    $region9: #{tpu_custom_call.1} parent=1 // pred_fallthru
      _
    %v23 = vlaneseq
    %v24 = vshrl.u32 %v23, 7
    %v25 = vlaneseq
    %v26 = vand.u32 %v25, 127
    %vm27 = vcmp.ge.s32.totalorder %v26, 32
    %v28 = vsel %vm27, 1, 0
    %vm29 = vcmp.ge.s32.totalorder %v26, 64
    %v30 = vsel %vm29, 1, 0
    %v31 = vadd.s32 %v28, %v30
    %v32 = vmul.u32 %v31, 32
    %v33 = vsub.s32 %v26, %v32
    %v34 = vmul.u32 %v24, 4
    %vm35 = vcmp.ge.s32.totalorder %v33, %v34
    %v36 = vadd.s32 %v34, 4
    %vm37 = vcmp.lt.s32.totalorder %v33, %v36
    %vm38 = vmand %vm35, %vm37
    %v39 = vsel %vm38, 1, 0
    %v40 = vcvt.s32.f32 %v39
    %v41 = vmul.f32 %v40, 0.083333336
    %v42 = vld [vmem:[#allocation2] sm:$0xff]
    %v43 = vld [vmem:[#allocation2 + $0x8] sm:$0xff]
    %v44 = vld [vmem:[#allocation2 + $0x10] sm:$0xff]
    %v45 = vld [vmem:[#allocation2 + $0x18] sm:$0xff]
    %v46 = vld [vmem:[#allocation2 + $0x20] sm:$0xff]
    %v47 = vld [vmem:[#allocation2 + $0x28] sm:$0xff]
    %v48 = vld [vmem:[#allocation2 + $0x30] sm:$0xff]
    %v49 = vld [vmem:[#allocation2 + $0x38] sm:$0xff]
    %v50 = vld [vmem:[#allocation2 + $0x40] sm:$0xff]
    %v51 = vld [vmem:[#allocation2 + $0x48] sm:$0xff]
    %v52 = vld [vmem:[#allocation2 + $0x50] sm:$0xff]
    %v53 = vld [vmem:[#allocation2 + $0x58] sm:$0xff]
    %vm54 = vcmask 785408
    %v56 = vsel %vm54, %v41, 0
    %58 = vmatprep.subr.mxu0 0.0
    %59 = vmatpush1.msra.mxu0 %v42
    %60 = vmatprep.subr.mxu0 0.0
    %61 = vmatpush1.msra.mxu0 %v43
    %62 = vmatprep.subr.mxu0 0.0
    %63 = vmatpush1.msra.mxu0 %v44
    %64 = vmatprep.subr.mxu0 0.0
    %65 = vmatpush1.msra.mxu0 %v45
    %66 = vmatprep.subr.mxu0 0.0
    %67 = vmatpush1.msra.mxu0 %v46
    %68 = vmatprep.subr.mxu0 0.0
    %69 = vmatpush1.msra.mxu0 %v47
    %70 = vmatprep.subr.mxu0 0.0
    %71 = vmatpush1.msra.mxu0 %v48
    %72 = vmatprep.subr.mxu0 0.0
    %73 = vmatpush1.msra.mxu0 %v49
    %74 = vmatprep.subr.mxu0 0.0
    %75 = vmatpush1.msra.mxu0 %v50
    %76 = vmatprep.subr.mxu0 0.0
    %77 = vmatpush1.msra.mxu0 %v51
    %78 = vmatprep.subr.mxu0 0.0
    %79 = vmatpush1.msra.mxu0 %v52
    %80 = vmatprep.subr.mxu0 0.0
    %81 = vmatpush1.msra.mxu0 %v53
    %82 = vmatprep.subr.mxu0 0.0
    %83 = vmatpush1.msra.mxu0 0.0
    %84 = vmatprep.subr.mxu0 0.0
    %85 = vmatpush1.msra.mxu0 0.0
    %86 = vmatprep.subr.mxu0 0.0
    %87 = vmatpush1.msra.mxu0 0.0
    %88 = vmatprep.subr.mxu0 0.0
    %89 = vmatpush1.msra.mxu0 0.0
    %90 = vmatprep.subr.mxu0 0.0
    %91 = vmatpush1.msra.mxu0 0.0
    %92 = vmatprep.subr.mxu0 0.0
    %93 = vmatpush1.msra.mxu0 0.0
    %94 = vmatprep.subr.mxu0 0.0
    %95 = vmatpush1.msra.mxu0 0.0
    %96 = vmatprep.subr.mxu0 0.0
    %97 = vmatpush1.msra.mxu0 0.0
    %98 = vmatprep.subr.mxu0 0.0
    %99 = vmatpush1.msra.mxu0 0.0
    %100 = vmatprep.subr.mxu0 0.0
    %101 = vmatpush1.msra.mxu0 0.0
    %102 = vmatprep.subr.mxu0 0.0
    %103 = vmatpush1.msra.mxu0 0.0
    %104 = vmatprep.subr.mxu0 0.0
    %105 = vmatpush1.msra.mxu0 0.0
    %106 = vmatprep.subr.mxu0 0.0
    %107 = vmatpush1.msra.mxu0 0.0
    %108 = vmatprep.subr.mxu0 0.0
    %109 = vmatpush1.msra.mxu0 0.0
    %110 = vmatprep.subr.mxu0 0.0
    %111 = vmatpush1.msra.mxu0 0.0
    %112 = vmatprep.subr.mxu0 0.0
    %113 = vmatpush1.msra.mxu0 0.0
    %114 = vmatprep.subr.mxu0 0.0
    %115 = vmatpush1.msra.mxu0 0.0
    %116 = vmatprep.subr.mxu0 0.0
    %117 = vmatpush1.msra.mxu0 0.0
    %118 = vmatprep.subr.mxu0 0.0
    %119 = vmatpush1.msra.mxu0 0.0
    %120 = vmatprep.subr.mxu0 0.0
    %121 = vmatpush1.msra.mxu0 0.0
    %122 = vmatprep.mubr.f32.mxu0 0.0
    %123 = vmatmul.mubr.f32.gmra.mrb[0].mxu0 %v56
    %v124 = vpop.f32.mrb[0].mxu0
    %v125 = vadd.f32 0.0, %v124
    %v126 = vpop.f32.mrb[0].mxu0
    %127 = vdwg.mxu0
    %v128 = vmul.f32 %v125, %v125
    %129 = vadd.xlane.f32.xlu0 %v128
    %v130 = vpop.xlane.xlu0 %129
    %v131 = vmul.f32 %v42, %v42
    %v132 = vmul.f32 %v43, %v43
    %v133 = vmul.f32 %v44, %v44
    %v134 = vmul.f32 %v45, %v45
    %v135 = vmul.f32 %v46, %v46
    %v136 = vmul.f32 %v47, %v47
    %v137 = vmul.f32 %v48, %v48
    %v138 = vmul.f32 %v49, %v49
    %v139 = vmul.f32 %v50, %v50
    %v140 = vmul.f32 %v51, %v51
    %v141 = vmul.f32 %v52, %v52
    %v142 = vmul.f32 %v53, %v53
    %143 = vmatprep.subr.mxu0 0.0
    %144 = vmatpush1.xpose.msra.mxu0 %v131
    %145 = vmatprep.subr.mxu0 0.0
    %146 = vmatpush1.xpose.msra.mxu0 %v132
    %147 = vmatprep.subr.mxu0 0.0
    %148 = vmatpush1.xpose.msra.mxu0 %v133
    %149 = vmatprep.subr.mxu0 0.0
    %150 = vmatpush1.xpose.msra.mxu0 %v134
    %151 = vmatprep.subr.mxu0 0.0
    %152 = vmatpush1.xpose.msra.mxu0 %v135
    %153 = vmatprep.subr.mxu0 0.0
    %154 = vmatpush1.xpose.msra.mxu0 %v136
    %155 = vmatprep.subr.mxu0 0.0
    %156 = vmatpush1.xpose.msra.mxu0 %v137
    %157 = vmatprep.subr.mxu0 0.0
    %158 = vmatpush1.xpose.msra.mxu0 %v138
    %159 = vmatprep.subr.mxu0 0.0
    %160 = vmatpush1.xpose.msra.mxu0 %v139
    %161 = vmatprep.subr.mxu0 0.0
    %162 = vmatpush1.xpose.msra.mxu0 %v140
    %163 = vmatprep.subr.mxu0 0.0
    %164 = vmatpush1.xpose.msra.mxu0 %v141
    %165 = vmatprep.subr.mxu0 0.0
    %166 = vmatpush1.xpose.msra.mxu0 %v142
    %167 = vmatprep.subr.mxu0 0.0
    %168 = vmatpush1.xpose.msra.mxu0 0.0
    %169 = vmatprep.subr.mxu0 0.0
    %170 = vmatpush1.xpose.msra.mxu0 0.0
    %171 = vmatprep.subr.mxu0 0.0
    %172 = vmatpush1.xpose.msra.mxu0 0.0
    %173 = vmatprep.subr.mxu0 0.0
    %174 = vmatpush1.xpose.msra.mxu0 0.0
    %175 = vmatprep.subr.mxu0 0.0
    %176 = vmatpush1.xpose.msra.mxu0 0.0
    %177 = vmatprep.subr.mxu0 0.0
    %178 = vmatpush1.xpose.msra.mxu0 0.0
    %179 = vmatprep.subr.mxu0 0.0
    %180 = vmatpush1.xpose.msra.mxu0 0.0
    %181 = vmatprep.subr.mxu0 0.0
    %182 = vmatpush1.xpose.msra.mxu0 0.0
    %183 = vmatprep.subr.mxu0 0.0
    %184 = vmatpush1.xpose.msra.mxu0 0.0
    %185 = vmatprep.subr.mxu0 0.0
    %186 = vmatpush1.xpose.msra.mxu0 0.0
    %187 = vmatprep.subr.mxu0 0.0
    %188 = vmatpush1.xpose.msra.mxu0 0.0
    %189 = vmatprep.subr.mxu0 0.0
    %190 = vmatpush1.xpose.msra.mxu0 0.0
    %191 = vmatprep.subr.mxu0 0.0
    %192 = vmatpush1.xpose.msra.mxu0 0.0
    %193 = vmatprep.subr.mxu0 0.0
    %194 = vmatpush1.xpose.msra.mxu0 0.0
    %195 = vmatprep.subr.mxu0 0.0
    %196 = vmatpush1.xpose.msra.mxu0 0.0
    %197 = vmatprep.subr.mxu0 0.0
    %198 = vmatpush1.xpose.msra.mxu0 0.0
    %199 = vmatprep.subr.mxu0 0.0
    %200 = vmatpush1.xpose.msra.mxu0 0.0
    %201 = vmatprep.subr.mxu0 0.0
    %202 = vmatpush1.xpose.msra.mxu0 0.0
    %203 = vmatprep.subr.mxu0 0.0
    %204 = vmatpush1.xpose.msra.mxu0 0.0
    %205 = vmatprep.subr.mxu0 0.0
    %206 = vmatpush1.xpose.msra.mxu0 0.0
    %207 = vmatprep.mubr.f32.mxu0 0.0
    %208 = vmatmul.mubr.f32.gmra.mrb[0].mxu0 1.0
    %v209 = vpop.f32.mrb[0].mxu0
    %v210 = vadd.f32 0.0, %v209
    %v211 = vpop.f32.mrb[0].mxu0
    %212 = vdwg.mxu0
    %213 = vmatprep.subr.mxu0 0.0
    %214 = vmatpush1.xpose.msra.mxu0 %v42
    %215 = vmatprep.subr.mxu0 0.0
    %216 = vmatpush1.xpose.msra.mxu0 %v43
    %217 = vmatprep.subr.mxu0 0.0
    %218 = vmatpush1.xpose.msra.mxu0 %v44
    %219 = vmatprep.subr.mxu0 0.0
    %220 = vmatpush1.xpose.msra.mxu0 %v45
    %221 = vmatprep.subr.mxu0 0.0
    %222 = vmatpush1.xpose.msra.mxu0 %v46
    %223 = vmatprep.subr.mxu0 0.0
    %224 = vmatpush1.xpose.msra.mxu0 %v47
    %225 = vmatprep.subr.mxu0 0.0
    %226 = vmatpush1.xpose.msra.mxu0 %v48
    %227 = vmatprep.subr.mxu0 0.0
    %228 = vmatpush1.xpose.msra.mxu0 %v49
    %229 = vmatprep.subr.mxu0 0.0
    %230 = vmatpush1.xpose.msra.mxu0 %v50
    %231 = vmatprep.subr.mxu0 0.0
    %232 = vmatpush1.xpose.msra.mxu0 %v51
    %233 = vmatprep.subr.mxu0 0.0
    %234 = vmatpush1.xpose.msra.mxu0 %v52
    %235 = vmatprep.subr.mxu0 0.0
    %236 = vmatpush1.xpose.msra.mxu0 %v53
    %237 = vmatprep.subr.mxu0 0.0
    %238 = vmatpush1.xpose.msra.mxu0 0.0
    %239 = vmatprep.subr.mxu0 0.0
    %240 = vmatpush1.xpose.msra.mxu0 0.0
    %241 = vmatprep.subr.mxu0 0.0
    %242 = vmatpush1.xpose.msra.mxu0 0.0
    %243 = vmatprep.subr.mxu0 0.0
    %244 = vmatpush1.xpose.msra.mxu0 0.0
    %245 = vmatprep.subr.mxu0 0.0
    %246 = vmatpush1.xpose.msra.mxu0 0.0
    %247 = vmatprep.subr.mxu0 0.0
    %248 = vmatpush1.xpose.msra.mxu0 0.0
    %249 = vmatprep.subr.mxu0 0.0
    %250 = vmatpush1.xpose.msra.mxu0 0.0
    %251 = vmatprep.subr.mxu0 0.0
    %252 = vmatpush1.xpose.msra.mxu0 0.0
    %253 = vmatprep.subr.mxu0 0.0
    %254 = vmatpush1.xpose.msra.mxu0 0.0
    %255 = vmatprep.subr.mxu0 0.0
    %256 = vmatpush1.xpose.msra.mxu0 0.0
    %257 = vmatprep.subr.mxu0 0.0
    %258 = vmatpush1.xpose.msra.mxu0 0.0
    %259 = vmatprep.subr.mxu0 0.0
    %260 = vmatpush1.xpose.msra.mxu0 0.0
    %261 = vmatprep.subr.mxu0 0.0
    %262 = vmatpush1.xpose.msra.mxu0 0.0
    %263 = vmatprep.subr.mxu0 0.0
    %264 = vmatpush1.xpose.msra.mxu0 0.0
    %265 = vmatprep.subr.mxu0 0.0
    %266 = vmatpush1.xpose.msra.mxu0 0.0
    %267 = vmatprep.subr.mxu0 0.0
    %268 = vmatpush1.xpose.msra.mxu0 0.0
    %269 = vmatprep.subr.mxu0 0.0
    %270 = vmatpush1.xpose.msra.mxu0 0.0
    %271 = vmatprep.subr.mxu0 0.0
    %272 = vmatpush1.xpose.msra.mxu0 0.0
    %273 = vmatprep.subr.mxu0 0.0
    %274 = vmatpush1.xpose.msra.mxu0 0.0
    %275 = vmatprep.subr.mxu0 0.0
    %276 = vmatpush1.xpose.msra.mxu0 0.0
    %277 = vmatprep.mubr.f32.mxu0 0.0
    %278 = vmatmul.mubr.f32.gmra.mrb[0].mxu0 %v125
    %v279 = vpop.f32.mrb[0].mxu0
    %v280 = vadd.f32 0.0, %v279
    %v281 = vpop.f32.mrb[0].mxu0
    %282 = vdwg.mxu0
    %v283 = vlaneseq
    %v284 = vshrl.u32 %v283, 7
    %v285 = vsub.s32 0, %v284
    %v286 = vrot.slane %v210, %v285
    %v287 = vadd.f32 %v130, %v286
    %v288 = vmul.f32 %v280, 2.0
    %v289 = vsub.f32 %v287, %v288
    %v290 = vmax.f32 %v289, 1e-12
    %v291 = vrsqrt.pop %v290
    %v292 = vmul.f32 %v290, %v291
    %vm293 = vcmp.eq.f32.partialorder %v290, inf
    %v294 = vsel %vm293, %v290, %v292
    %vm295 = vcmp.eq.f32.partialorder %v290, 0.0
    %v296 = vand.u32 %v290, 2147483648
    %v297 = vsel %vm295, %v296, %v294
    %v298 = vmul.f32 %v297, %v40
    %v299 = vsel %vm54, %v298, 0.0
    %300 = vadd.xlane.f32.xlu0 %v299
    %v301 = vpop.xlane.xlu0 %300
    %v302 = vrot.slane %v301, 4
    %v303 = vadd.f32 %v301, %v302
    %v304 = vrot.slane %v303, 2
    %v305 = vadd.f32 %v303, %v304
    %v306 = vrot.slane %v305, 1
    %v307 = vadd.f32 %v305, %v306
    %s308 = vtos %v307
    %s309 = smul.f32 %s308, 0.010416667
    %v310 = vsub.f32 0.6, %v297
    %v311 = vmax.f32 %v310, 0.0
    %v312 = vsub.f32 1.0, %v40
    %v313 = vmul.f32 %v311, %v312
    %v314 = vsel %vm54, %v313, 0.0
    %315 = vadd.xlane.f32.xlu0 %v314
    %v316 = vpop.xlane.xlu0 %315
    %v317 = vrot.slane %v316, 4
    %v318 = vadd.f32 %v316, %v317
    %v319 = vrot.slane %v318, 2
    %v320 = vadd.f32 %v318, %v319
    %v321 = vrot.slane %v320, 1
    %v322 = vadd.f32 %v320, %v321
    %s323 = vtos %v322
    %s324 = smul.f32 %s323, 0.0014880953
    %s325 = sadd.f32 %s309, %s324
    %v326 = vstv %s325
    %327 = vst [vmem:[#allocation5] sm:$0x1] %v326
    %s328 = scalar_lea.vmem [#allocation2], 96
    %v329 = vld [vmem:[%s328] sm:$0xff]
    %v330 = vld [vmem:[%s328 + $0x8] sm:$0xff]
    %v331 = vld [vmem:[%s328 + $0x10] sm:$0xff]
    %v332 = vld [vmem:[%s328 + $0x18] sm:$0xff]
    %v333 = vld [vmem:[%s328 + $0x20] sm:$0xff]
    %v334 = vld [vmem:[%s328 + $0x28] sm:$0xff]
    %v335 = vld [vmem:[%s328 + $0x30] sm:$0xff]
    %v336 = vld [vmem:[%s328 + $0x38] sm:$0xff]
    %v337 = vld [vmem:[%s328 + $0x40] sm:$0xff]
    %v338 = vld [vmem:[%s328 + $0x48] sm:$0xff]
    %v339 = vld [vmem:[%s328 + $0x50] sm:$0xff]
    %v340 = vld [vmem:[%s328 + $0x58] sm:$0xff]
    %341 = vmatprep.subr.mxu0 0.0
    %342 = vmatpush1.msra.mxu0 %v329
    %343 = vmatprep.subr.mxu0 0.0
    %344 = vmatpush1.msra.mxu0 %v330
    %345 = vmatprep.subr.mxu0 0.0
    %346 = vmatpush1.msra.mxu0 %v331
    %347 = vmatprep.subr.mxu0 0.0
    %348 = vmatpush1.msra.mxu0 %v332
    %349 = vmatprep.subr.mxu0 0.0
    %350 = vmatpush1.msra.mxu0 %v333
    %351 = vmatprep.subr.mxu0 0.0
    %352 = vmatpush1.msra.mxu0 %v334
    %353 = vmatprep.subr.mxu0 0.0
    %354 = vmatpush1.msra.mxu0 %v335
    %355 = vmatprep.subr.mxu0 0.0
    %356 = vmatpush1.msra.mxu0 %v336
    %357 = vmatprep.subr.mxu0 0.0
    %358 = vmatpush1.msra.mxu0 %v337
    %359 = vmatprep.subr.mxu0 0.0
    %360 = vmatpush1.msra.mxu0 %v338
    %361 = vmatprep.subr.mxu0 0.0
    %362 = vmatpush1.msra.mxu0 %v339
    %363 = vmatprep.subr.mxu0 0.0
    %364 = vmatpush1.msra.mxu0 %v340
    %365 = vmatprep.subr.mxu0 0.0
    %366 = vmatpush1.msra.mxu0 0.0
    %367 = vmatprep.subr.mxu0 0.0
    %368 = vmatpush1.msra.mxu0 0.0
    %369 = vmatprep.subr.mxu0 0.0
    %370 = vmatpush1.msra.mxu0 0.0
    %371 = vmatprep.subr.mxu0 0.0
    %372 = vmatpush1.msra.mxu0 0.0
    %373 = vmatprep.subr.mxu0 0.0
    %374 = vmatpush1.msra.mxu0 0.0
    %375 = vmatprep.subr.mxu0 0.0
    %376 = vmatpush1.msra.mxu0 0.0
    %377 = vmatprep.subr.mxu0 0.0
    %378 = vmatpush1.msra.mxu0 0.0
    %379 = vmatprep.subr.mxu0 0.0
    %380 = vmatpush1.msra.mxu0 0.0
    %381 = vmatprep.subr.mxu0 0.0
    %382 = vmatpush1.msra.mxu0 0.0
    %383 = vmatprep.subr.mxu0 0.0
    %384 = vmatpush1.msra.mxu0 0.0
    %385 = vmatprep.subr.mxu0 0.0
    %386 = vmatpush1.msra.mxu0 0.0
    %387 = vmatprep.subr.mxu0 0.0
    %388 = vmatpush1.msra.mxu0 0.0
    %389 = vmatprep.subr.mxu0 0.0
    %390 = vmatpush1.msra.mxu0 0.0
    %391 = vmatprep.subr.mxu0 0.0
    %392 = vmatpush1.msra.mxu0 0.0
    %393 = vmatprep.subr.mxu0 0.0
    %394 = vmatpush1.msra.mxu0 0.0
    %395 = vmatprep.subr.mxu0 0.0
    %396 = vmatpush1.msra.mxu0 0.0
    %397 = vmatprep.subr.mxu0 0.0
    %398 = vmatpush1.msra.mxu0 0.0
    %399 = vmatprep.subr.mxu0 0.0
    %400 = vmatpush1.msra.mxu0 0.0
    %401 = vmatprep.subr.mxu0 0.0
    %402 = vmatpush1.msra.mxu0 0.0
    %403 = vmatprep.subr.mxu0 0.0
    %404 = vmatpush1.msra.mxu0 0.0
    %405 = vmatprep.mubr.f32.mxu0 0.0
    %406 = vmatmul.mubr.f32.gmra.mrb[0].mxu0 %v56
    %v407 = vpop.f32.mrb[0].mxu0
    %v408 = vadd.f32 0.0, %v407
    %v409 = vpop.f32.mrb[0].mxu0
    %410 = vdwg.mxu0
    %v411 = vmul.f32 %v408, %v408
    %412 = vadd.xlane.f32.xlu0 %v411
    %v413 = vpop.xlane.xlu0 %412
    %v414 = vmul.f32 %v329, %v329
    %v415 = vmul.f32 %v330, %v330
    %v416 = vmul.f32 %v331, %v331
    %v417 = vmul.f32 %v332, %v332
    %v418 = vmul.f32 %v333, %v333
    %v419 = vmul.f32 %v334, %v334
    %v420 = vmul.f32 %v335, %v335
    %v421 = vmul.f32 %v336, %v336
    %v422 = vmul.f32 %v337, %v337
    %v423 = vmul.f32 %v338, %v338
    %v424 = vmul.f32 %v339, %v339
    %v425 = vmul.f32 %v340, %v340
    %426 = vmatprep.subr.mxu0 0.0
    %427 = vmatpush1.xpose.msra.mxu0 %v414
    %428 = vmatprep.subr.mxu0 0.0
    %429 = vmatpush1.xpose.msra.mxu0 %v415
    %430 = vmatprep.subr.mxu0 0.0
    %431 = vmatpush1.xpose.msra.mxu0 %v416
    %432 = vmatprep.subr.mxu0 0.0
    %433 = vmatpush1.xpose.msra.mxu0 %v417
    %434 = vmatprep.subr.mxu0 0.0
    %435 = vmatpush1.xpose.msra.mxu0 %v418
    %436 = vmatprep.subr.mxu0 0.0
    %437 = vmatpush1.xpose.msra.mxu0 %v419
    %438 = vmatprep.subr.mxu0 0.0
    %439 = vmatpush1.xpose.msra.mxu0 %v420
    %440 = vmatprep.subr.mxu0 0.0
    %441 = vmatpush1.xpose.msra.mxu0 %v421
    %442 = vmatprep.subr.mxu0 0.0
    %443 = vmatpush1.xpose.msra.mxu0 %v422
    %444 = vmatprep.subr.mxu0 0.0
    %445 = vmatpush1.xpose.msra.mxu0 %v423
    %446 = vmatprep.subr.mxu0 0.0
    %447 = vmatpush1.xpose.msra.mxu0 %v424
    %448 = vmatprep.subr.mxu0 0.0
    %449 = vmatpush1.xpose.msra.mxu0 %v425
    %450 = vmatprep.subr.mxu0 0.0
    %451 = vmatpush1.xpose.msra.mxu0 0.0
    %452 = vmatprep.subr.mxu0 0.0
    %453 = vmatpush1.xpose.msra.mxu0 0.0
    %454 = vmatprep.subr.mxu0 0.0
    %455 = vmatpush1.xpose.msra.mxu0 0.0
    %456 = vmatprep.subr.mxu0 0.0
    %457 = vmatpush1.xpose.msra.mxu0 0.0
    %458 = vmatprep.subr.mxu0 0.0
    %459 = vmatpush1.xpose.msra.mxu0 0.0
    %460 = vmatprep.subr.mxu0 0.0
    %461 = vmatpush1.xpose.msra.mxu0 0.0
    %462 = vmatprep.subr.mxu0 0.0
    %463 = vmatpush1.xpose.msra.mxu0 0.0
    %464 = vmatprep.subr.mxu0 0.0
    %465 = vmatpush1.xpose.msra.mxu0 0.0
    %466 = vmatprep.subr.mxu0 0.0
    %467 = vmatpush1.xpose.msra.mxu0 0.0
    %468 = vmatprep.subr.mxu0 0.0
    %469 = vmatpush1.xpose.msra.mxu0 0.0
    %470 = vmatprep.subr.mxu0 0.0
    %471 = vmatpush1.xpose.msra.mxu0 0.0
    %472 = vmatprep.subr.mxu0 0.0
    %473 = vmatpush1.xpose.msra.mxu0 0.0
    %474 = vmatprep.subr.mxu0 0.0
    %475 = vmatpush1.xpose.msra.mxu0 0.0
    %476 = vmatprep.subr.mxu0 0.0
    %477 = vmatpush1.xpose.msra.mxu0 0.0
    %478 = vmatprep.subr.mxu0 0.0
    %479 = vmatpush1.xpose.msra.mxu0 0.0
    %480 = vmatprep.subr.mxu0 0.0
    %481 = vmatpush1.xpose.msra.mxu0 0.0
    %482 = vmatprep.subr.mxu0 0.0
    %483 = vmatpush1.xpose.msra.mxu0 0.0
    %484 = vmatprep.subr.mxu0 0.0
    %485 = vmatpush1.xpose.msra.mxu0 0.0
    %486 = vmatprep.subr.mxu0 0.0
    %487 = vmatpush1.xpose.msra.mxu0 0.0
    %488 = vmatprep.subr.mxu0 0.0
    %489 = vmatpush1.xpose.msra.mxu0 0.0
    %490 = vmatprep.mubr.f32.mxu0 0.0
    %491 = vmatmul.mubr.f32.gmra.mrb[0].mxu0 1.0
    %v492 = vpop.f32.mrb[0].mxu0
    %v493 = vadd.f32 0.0, %v492
    %v494 = vpop.f32.mrb[0].mxu0
    %495 = vdwg.mxu0
    %496 = vmatprep.subr.mxu0 0.0
    %497 = vmatpush1.xpose.msra.mxu0 %v329
    %498 = vmatprep.subr.mxu0 0.0
    %499 = vmatpush1.xpose.msra.mxu0 %v330
    %500 = vmatprep.subr.mxu0 0.0
    %501 = vmatpush1.xpose.msra.mxu0 %v331
    %502 = vmatprep.subr.mxu0 0.0
    %503 = vmatpush1.xpose.msra.mxu0 %v332
    %504 = vmatprep.subr.mxu0 0.0
    %505 = vmatpush1.xpose.msra.mxu0 %v333
    %506 = vmatprep.subr.mxu0 0.0
    %507 = vmatpush1.xpose.msra.mxu0 %v334
    %508 = vmatprep.subr.mxu0 0.0
    %509 = vmatpush1.xpose.msra.mxu0 %v335
    %510 = vmatprep.subr.mxu0 0.0
    %511 = vmatpush1.xpose.msra.mxu0 %v336
    %512 = vmatprep.subr.mxu0 0.0
    %513 = vmatpush1.xpose.msra.mxu0 %v337
    %514 = vmatprep.subr.mxu0 0.0
    %515 = vmatpush1.xpose.msra.mxu0 %v338
    %516 = vmatprep.subr.mxu0 0.0
    %517 = vmatpush1.xpose.msra.mxu0 %v339
    %518 = vmatprep.subr.mxu0 0.0
    %519 = vmatpush1.xpose.msra.mxu0 %v340
    %520 = vmatprep.subr.mxu0 0.0
    %521 = vmatpush1.xpose.msra.mxu0 0.0
    %522 = vmatprep.subr.mxu0 0.0
    %523 = vmatpush1.xpose.msra.mxu0 0.0
    %524 = vmatprep.subr.mxu0 0.0
    %525 = vmatpush1.xpose.msra.mxu0 0.0
    %526 = vmatprep.subr.mxu0 0.0
    %527 = vmatpush1.xpose.msra.mxu0 0.0
    %528 = vmatprep.subr.mxu0 0.0
    %529 = vmatpush1.xpose.msra.mxu0 0.0
    %530 = vmatprep.subr.mxu0 0.0
    %531 = vmatpush1.xpose.msra.mxu0 0.0
    %532 = vmatprep.subr.mxu0 0.0
    %533 = vmatpush1.xpose.msra.mxu0 0.0
    %534 = vmatprep.subr.mxu0 0.0
    %535 = vmatpush1.xpose.msra.mxu0 0.0
    %536 = vmatprep.subr.mxu0 0.0
    %537 = vmatpush1.xpose.msra.mxu0 0.0
    %538 = vmatprep.subr.mxu0 0.0
    %539 = vmatpush1.xpose.msra.mxu0 0.0
    %540 = vmatprep.subr.mxu0 0.0
    %541 = vmatpush1.xpose.msra.mxu0 0.0
    %542 = vmatprep.subr.mxu0 0.0
    %543 = vmatpush1.xpose.msra.mxu0 0.0
    %544 = vmatprep.subr.mxu0 0.0
    %545 = vmatpush1.xpose.msra.mxu0 0.0
    %546 = vmatprep.subr.mxu0 0.0
    %547 = vmatpush1.xpose.msra.mxu0 0.0
    %548 = vmatprep.subr.mxu0 0.0
    %549 = vmatpush1.xpose.msra.mxu0 0.0
    %550 = vmatprep.subr.mxu0 0.0
    %551 = vmatpush1.xpose.msra.mxu0 0.0
    %552 = vmatprep.subr.mxu0 0.0
    %553 = vmatpush1.xpose.msra.mxu0 0.0
    %554 = vmatprep.subr.mxu0 0.0
    %555 = vmatpush1.xpose.msra.mxu0 0.0
    %556 = vmatprep.subr.mxu0 0.0
    %557 = vmatpush1.xpose.msra.mxu0 0.0
    %558 = vmatprep.subr.mxu0 0.0
    %559 = vmatpush1.xpose.msra.mxu0 0.0
    %560 = vmatprep.mubr.f32.mxu0 0.0
    %561 = vmatmul.mubr.f32.gmra.mrb[0].mxu0 %v408
    %v562 = vpop.f32.mrb[0].mxu0
    %v563 = vadd.f32 0.0, %v562
    %v564 = vpop.f32.mrb[0].mxu0
    %565 = vdwg.mxu0
    %v566 = vlaneseq
    %v567 = vshrl.u32 %v566, 7
    %v568 = vsub.s32 0, %v567
    %v569 = vrot.slane %v493, %v568
    %v570 = vadd.f32 %v413, %v569
    %v571 = vmul.f32 %v563, 2.0
    %v572 = vsub.f32 %v570, %v571
    %v573 = vmax.f32 %v572, 1e-12
    %v574 = vrsqrt.pop %v573
    %v575 = vmul.f32 %v573, %v574
    %vm576 = vcmp.eq.f32.partialorder %v573, inf
    %v577 = vsel %vm576, %v573, %v575
    %vm578 = vcmp.eq.f32.partialorder %v573, 0.0
    %v579 = vand.u32 %v573, 2147483648
    %v580 = vsel %vm578, %v579, %v577
    %v581 = vmul.f32 %v580, %v40
    %v582 = vsel %vm54, %v581, 0.0
    %583 = vadd.xlane.f32.xlu0 %v582
    %v584 = vpop.xlane.xlu0 %583
    %v585 = vrot.slane %v584, 4
    %v586 = vadd.f32 %v584, %v585
    %v587 = vrot.slane %v586, 2
    %v588 = vadd.f32 %v586, %v587
    %v589 = vrot.slane %v588, 1
    %v590 = vadd.f32 %v588, %v589
    %s591 = vtos %v590
    %s592 = smul.f32 %s591, 0.010416667
    %v593 = vsub.f32 0.6, %v580
    %v594 = vmax.f32 %v593, 0.0
    %v595 = vmul.f32 %v594, %v312
    %v596 = vsel %vm54, %v595, 0.0
    %597 = vadd.xlane.f32.xlu0 %v596
    %v598 = vpop.xlane.xlu0 %597
    %v599 = vrot.slane %v598, 4
    %v600 = vadd.f32 %v598, %v599
    %v601 = vrot.slane %v600, 2
    %v602 = vadd.f32 %v600, %v601
    %v603 = vrot.slane %v602, 1
    %v604 = vadd.f32 %v602, %v603
    %s605 = vtos %v604
    %s606 = smul.f32 %s605, 0.0014880953
    %s607 = sadd.f32 %s592, %s606
    %v608 = vstv %s607
    %609 = vst [vmem:[#allocation5 + $0x1] sm:$0x1] %v608
    %s610 = scalar_lea.vmem [#allocation2], 192
    %v611 = vld [vmem:[%s610] sm:$0xff]
    %v612 = vld [vmem:[%s610 + $0x8] sm:$0xff]
    %v613 = vld [vmem:[%s610 + $0x10] sm:$0xff]
    %v614 = vld [vmem:[%s610 + $0x18] sm:$0xff]
    %v615 = vld [vmem:[%s610 + $0x20] sm:$0xff]
    %v616 = vld [vmem:[%s610 + $0x28] sm:$0xff]
    %v617 = vld [vmem:[%s610 + $0x30] sm:$0xff]
    %v618 = vld [vmem:[%s610 + $0x38] sm:$0xff]
    %v619 = vld [vmem:[%s610 + $0x40] sm:$0xff]
    %v620 = vld [vmem:[%s610 + $0x48] sm:$0xff]
    %v621 = vld [vmem:[%s610 + $0x50] sm:$0xff]
    %v622 = vld [vmem:[%s610 + $0x58] sm:$0xff]
    %623 = vmatprep.subr.mxu0 0.0
    %624 = vmatpush1.msra.mxu0 %v611
    %625 = vmatprep.subr.mxu0 0.0
    %626 = vmatpush1.msra.mxu0 %v612
    %627 = vmatprep.subr.mxu0 0.0
    %628 = vmatpush1.msra.mxu0 %v613
    %629 = vmatprep.subr.mxu0 0.0
    %630 = vmatpush1.msra.mxu0 %v614
    %631 = vmatprep.subr.mxu0 0.0
    %632 = vmatpush1.msra.mxu0 %v615
    %633 = vmatprep.subr.mxu0 0.0
    %634 = vmatpush1.msra.mxu0 %v616
    %635 = vmatprep.subr.mxu0 0.0
    %636 = vmatpush1.msra.mxu0 %v617
    %637 = vmatprep.subr.mxu0 0.0
    %638 = vmatpush1.msra.mxu0 %v618
    %639 = vmatprep.subr.mxu0 0.0
    %640 = vmatpush1.msra.mxu0 %v619
    %641 = vmatprep.subr.mxu0 0.0
    %642 = vmatpush1.msra.mxu0 %v620
    %643 = vmatprep.subr.mxu0 0.0
    %644 = vmatpush1.msra.mxu0 %v621
    %645 = vmatprep.subr.mxu0 0.0
    %646 = vmatpush1.msra.mxu0 %v622
    %647 = vmatprep.subr.mxu0 0.0
    %648 = vmatpush1.msra.mxu0 0.0
    %649 = vmatprep.subr.mxu0 0.0
    %650 = vmatpush1.msra.mxu0 0.0
    %651 = vmatprep.subr.mxu0 0.0
    %652 = vmatpush1.msra.mxu0 0.0
    %653 = vmatprep.subr.mxu0 0.0
    %654 = vmatpush1.msra.mxu0 0.0
    %655 = vmatprep.subr.mxu0 0.0
    %656 = vmatpush1.msra.mxu0 0.0
    %657 = vmatprep.subr.mxu0 0.0
    %658 = vmatpush1.msra.mxu0 0.0
    %659 = vmatprep.subr.mxu0 0.0
    %660 = vmatpush1.msra.mxu0 0.0
    %661 = vmatprep.subr.mxu0 0.0
    %662 = vmatpush1.msra.mxu0 0.0
    %663 = vmatprep.subr.mxu0 0.0
    %664 = vmatpush1.msra.mxu0 0.0
    %665 = vmatprep.subr.mxu0 0.0
    %666 = vmatpush1.msra.mxu0 0.0
    %667 = vmatprep.subr.mxu0 0.0
    %668 = vmatpush1.msra.mxu0 0.0
    %669 = vmatprep.subr.mxu0 0.0
    %670 = vmatpush1.msra.mxu0 0.0
    %671 = vmatprep.subr.mxu0 0.0
    %672 = vmatpush1.msra.mxu0 0.0
    %673 = vmatprep.subr.mxu0 0.0
    %674 = vmatpush1.msra.mxu0 0.0
    %675 = vmatprep.subr.mxu0 0.0
    %676 = vmatpush1.msra.mxu0 0.0
    %677 = vmatprep.subr.mxu0 0.0
    %678 = vmatpush1.msra.mxu0 0.0
    %679 = vmatprep.subr.mxu0 0.0
    %680 = vmatpush1.msra.mxu0 0.0
    %681 = vmatprep.subr.mxu0 0.0
    %682 = vmatpush1.msra.mxu0 0.0
    %683 = vmatprep.subr.mxu0 0.0
    %684 = vmatpush1.msra.mxu0 0.0
    %685 = vmatprep.subr.mxu0 0.0
    %686 = vmatpush1.msra.mxu0 0.0
    %687 = vmatprep.mubr.f32.mxu0 0.0
    %688 = vmatmul.mubr.f32.gmra.mrb[0].mxu0 %v56
    %v689 = vpop.f32.mrb[0].mxu0
    %v690 = vadd.f32 0.0, %v689
    %v691 = vpop.f32.mrb[0].mxu0
    %692 = vdwg.mxu0
    %v693 = vmul.f32 %v690, %v690
    %694 = vadd.xlane.f32.xlu0 %v693
    %v695 = vpop.xlane.xlu0 %694
    %v696 = vmul.f32 %v611, %v611
    %v697 = vmul.f32 %v612, %v612
    %v698 = vmul.f32 %v613, %v613
    %v699 = vmul.f32 %v614, %v614
    %v700 = vmul.f32 %v615, %v615
    %v701 = vmul.f32 %v616, %v616
    %v702 = vmul.f32 %v617, %v617
    %v703 = vmul.f32 %v618, %v618
    %v704 = vmul.f32 %v619, %v619
    %v705 = vmul.f32 %v620, %v620
    %v706 = vmul.f32 %v621, %v621
    %v707 = vmul.f32 %v622, %v622
    %708 = vmatprep.subr.mxu0 0.0
    %709 = vmatpush1.xpose.msra.mxu0 %v696
    %710 = vmatprep.subr.mxu0 0.0
    %711 = vmatpush1.xpose.msra.mxu0 %v697
    %712 = vmatprep.subr.mxu0 0.0
    %713 = vmatpush1.xpose.msra.mxu0 %v698
    %714 = vmatprep.subr.mxu0 0.0
    %715 = vmatpush1.xpose.msra.mxu0 %v699
    %716 = vmatprep.subr.mxu0 0.0
    %717 = vmatpush1.xpose.msra.mxu0 %v700
    %718 = vmatprep.subr.mxu0 0.0
    %719 = vmatpush1.xpose.msra.mxu0 %v701
    %720 = vmatprep.subr.mxu0 0.0
    %721 = vmatpush1.xpose.msra.mxu0 %v702
    %722 = vmatprep.subr.mxu0 0.0
    %723 = vmatpush1.xpose.msra.mxu0 %v703
    %724 = vmatprep.subr.mxu0 0.0
    %725 = vmatpush1.xpose.msra.mxu0 %v704
    %726 = vmatprep.subr.mxu0 0.0
    %727 = vmatpush1.xpose.msra.mxu0 %v705
    %728 = vmatprep.subr.mxu0 0.0
    %729 = vmatpush1.xpose.msra.mxu0 %v706
    %730 = vmatprep.subr.mxu0 0.0
    %731 = vmatpush1.xpose.msra.mxu0 %v707
    %732 = vmatprep.subr.mxu0 0.0
    %733 = vmatpush1.xpose.msra.mxu0 0.0
    %734 = vmatprep.subr.mxu0 0.0
    %735 = vmatpush1.xpose.msra.mxu0 0.0
    %736 = vmatprep.subr.mxu0 0.0
    %737 = vmatpush1.xpose.msra.mxu0 0.0
    %738 = vmatprep.subr.mxu0 0.0
    %739 = vmatpush1.xpose.msra.mxu0 0.0
    %740 = vmatprep.subr.mxu0 0.0
    %741 = vmatpush1.xpose.msra.mxu0 0.0
    %742 = vmatprep.subr.mxu0 0.0
    %743 = vmatpush1.xpose.msra.mxu0 0.0
    %744 = vmatprep.subr.mxu0 0.0
    %745 = vmatpush1.xpose.msra.mxu0 0.0
    %746 = vmatprep.subr.mxu0 0.0
    %747 = vmatpush1.xpose.msra.mxu0 0.0
    %748 = vmatprep.subr.mxu0 0.0
    %749 = vmatpush1.xpose.msra.mxu0 0.0
    %750 = vmatprep.subr.mxu0 0.0
    %751 = vmatpush1.xpose.msra.mxu0 0.0
    %752 = vmatprep.subr.mxu0 0.0
    %753 = vmatpush1.xpose.msra.mxu0 0.0
    %754 = vmatprep.subr.mxu0 0.0
    %755 = vmatpush1.xpose.msra.mxu0 0.0
    %756 = vmatprep.subr.mxu0 0.0
    %757 = vmatpush1.xpose.msra.mxu0 0.0
    %758 = vmatprep.subr.mxu0 0.0
    %759 = vmatpush1.xpose.msra.mxu0 0.0
    %760 = vmatprep.subr.mxu0 0.0
    %761 = vmatpush1.xpose.msra.mxu0 0.0
    %762 = vmatprep.subr.mxu0 0.0
    %763 = vmatpush1.xpose.msra.mxu0 0.0
    %764 = vmatprep.subr.mxu0 0.0
    %765 = vmatpush1.xpose.msra.mxu0 0.0
    %766 = vmatprep.subr.mxu0 0.0
    %767 = vmatpush1.xpose.msra.mxu0 0.0
    %768 = vmatprep.subr.mxu0 0.0
    %769 = vmatpush1.xpose.msra.mxu0 0.0
    %770 = vmatprep.subr.mxu0 0.0
    %771 = vmatpush1.xpose.msra.mxu0 0.0
    %772 = vmatprep.mubr.f32.mxu0 0.0
    %773 = vmatmul.mubr.f32.gmra.mrb[0].mxu0 1.0
    %v774 = vpop.f32.mrb[0].mxu0
    %v775 = vadd.f32 0.0, %v774
    %v776 = vpop.f32.mrb[0].mxu0
    %777 = vdwg.mxu0
    %778 = vmatprep.subr.mxu0 0.0
    %779 = vmatpush1.xpose.msra.mxu0 %v611
    %780 = vmatprep.subr.mxu0 0.0
    %781 = vmatpush1.xpose.msra.mxu0 %v612
    %782 = vmatprep.subr.mxu0 0.0
    %783 = vmatpush1.xpose.msra.mxu0 %v613
    %784 = vmatprep.subr.mxu0 0.0
    %785 = vmatpush1.xpose.msra.mxu0 %v614
    %786 = vmatprep.subr.mxu0 0.0
    %787 = vmatpush1.xpose.msra.mxu0 %v615
    %788 = vmatprep.subr.mxu0 0.0
    %789 = vmatpush1.xpose.msra.mxu0 %v616
    %790 = vmatprep.subr.mxu0 0.0
    %791 = vmatpush1.xpose.msra.mxu0 %v617
    %792 = vmatprep.subr.mxu0 0.0
    %793 = vmatpush1.xpose.msra.mxu0 %v618
    %794 = vmatprep.subr.mxu0 0.0
    %795 = vmatpush1.xpose.msra.mxu0 %v619
    %796 = vmatprep.subr.mxu0 0.0
    %797 = vmatpush1.xpose.msra.mxu0 %v620
    %798 = vmatprep.subr.mxu0 0.0
    %799 = vmatpush1.xpose.msra.mxu0 %v621
    %800 = vmatprep.subr.mxu0 0.0
    %801 = vmatpush1.xpose.msra.mxu0 %v622
    %802 = vmatprep.subr.mxu0 0.0
    %803 = vmatpush1.xpose.msra.mxu0 0.0
    %804 = vmatprep.subr.mxu0 0.0
    %805 = vmatpush1.xpose.msra.mxu0 0.0
    %806 = vmatprep.subr.mxu0 0.0
    %807 = vmatpush1.xpose.msra.mxu0 0.0
    %808 = vmatprep.subr.mxu0 0.0
    %809 = vmatpush1.xpose.msra.mxu0 0.0
    %810 = vmatprep.subr.mxu0 0.0
    %811 = vmatpush1.xpose.msra.mxu0 0.0
    %812 = vmatprep.subr.mxu0 0.0
    %813 = vmatpush1.xpose.msra.mxu0 0.0
    %814 = vmatprep.subr.mxu0 0.0
    %815 = vmatpush1.xpose.msra.mxu0 0.0
    %816 = vmatprep.subr.mxu0 0.0
    %817 = vmatpush1.xpose.msra.mxu0 0.0
    %818 = vmatprep.subr.mxu0 0.0
    %819 = vmatpush1.xpose.msra.mxu0 0.0
    %820 = vmatprep.subr.mxu0 0.0
    %821 = vmatpush1.xpose.msra.mxu0 0.0
    %822 = vmatprep.subr.mxu0 0.0
    %823 = vmatpush1.xpose.msra.mxu0 0.0
    %824 = vmatprep.subr.mxu0 0.0
    %825 = vmatpush1.xpose.msra.mxu0 0.0
    %826 = vmatprep.subr.mxu0 0.0
    %827 = vmatpush1.xpose.msra.mxu0 0.0
    %828 = vmatprep.subr.mxu0 0.0
    %829 = vmatpush1.xpose.msra.mxu0 0.0
    %830 = vmatprep.subr.mxu0 0.0
    %831 = vmatpush1.xpose.msra.mxu0 0.0
    %832 = vmatprep.subr.mxu0 0.0
    %833 = vmatpush1.xpose.msra.mxu0 0.0
    %834 = vmatprep.subr.mxu0 0.0
    %835 = vmatpush1.xpose.msra.mxu0 0.0
    %836 = vmatprep.subr.mxu0 0.0
    %837 = vmatpush1.xpose.msra.mxu0 0.0
    %838 = vmatprep.subr.mxu0 0.0
    %839 = vmatpush1.xpose.msra.mxu0 0.0
    %840 = vmatprep.subr.mxu0 0.0
    %841 = vmatpush1.xpose.msra.mxu0 0.0
    %842 = vmatprep.mubr.f32.mxu0 0.0
    %843 = vmatmul.mubr.f32.gmra.mrb[0].mxu0 %v690
    %v844 = vpop.f32.mrb[0].mxu0
    %v845 = vadd.f32 0.0, %v844
    %v846 = vpop.f32.mrb[0].mxu0
    %847 = vdwg.mxu0
    %v848 = vlaneseq
    %v849 = vshrl.u32 %v848, 7
    %v850 = vsub.s32 0, %v849
    %v851 = vrot.slane %v775, %v850
    %v852 = vadd.f32 %v695, %v851
    %v853 = vmul.f32 %v845, 2.0
    %v854 = vsub.f32 %v852, %v853
    %v855 = vmax.f32 %v854, 1e-12
    %v856 = vrsqrt.pop %v855
    %v857 = vmul.f32 %v855, %v856
    %vm858 = vcmp.eq.f32.partialorder %v855, inf
    %v859 = vsel %vm858, %v855, %v857
    %vm860 = vcmp.eq.f32.partialorder %v855, 0.0
    %v861 = vand.u32 %v855, 2147483648
    %v862 = vsel %vm860, %v861, %v859
    %v863 = vmul.f32 %v862, %v40
    %v864 = vsel %vm54, %v863, 0.0
    %865 = vadd.xlane.f32.xlu0 %v864
    %v866 = vpop.xlane.xlu0 %865
    %v867 = vrot.slane %v866, 4
    %v868 = vadd.f32 %v866, %v867
    %v869 = vrot.slane %v868, 2
    %v870 = vadd.f32 %v868, %v869
    %v871 = vrot.slane %v870, 1
    %v872 = vadd.f32 %v870, %v871
    %s873 = vtos %v872
    %s874 = smul.f32 %s873, 0.010416667
    %v875 = vsub.f32 0.6, %v862
    %v876 = vmax.f32 %v875, 0.0
    %v877 = vmul.f32 %v876, %v312
    %v878 = vsel %vm54, %v877, 0.0
    %879 = vadd.xlane.f32.xlu0 %v878
    %v880 = vpop.xlane.xlu0 %879
    %v881 = vrot.slane %v880, 4
    %v882 = vadd.f32 %v880, %v881
    %v883 = vrot.slane %v882, 2
    %v884 = vadd.f32 %v882, %v883
    %v885 = vrot.slane %v884, 1
    %v886 = vadd.f32 %v884, %v885
    %s887 = vtos %v886
    %s888 = smul.f32 %s887, 0.0014880953
    %s889 = sadd.f32 %s874, %s888
    %v890 = vstv %s889
    %891 = vst [vmem:[#allocation5 + $0x2] sm:$0x1] %v890
    %s892 = scalar_lea.vmem [#allocation2], 288
    %v893 = vld [vmem:[%s892] sm:$0xff]
    %v894 = vld [vmem:[%s892 + $0x8] sm:$0xff]
    %v895 = vld [vmem:[%s892 + $0x10] sm:$0xff]
    %v896 = vld [vmem:[%s892 + $0x18] sm:$0xff]
    %v897 = vld [vmem:[%s892 + $0x20] sm:$0xff]
    %v898 = vld [vmem:[%s892 + $0x28] sm:$0xff]
    %v899 = vld [vmem:[%s892 + $0x30] sm:$0xff]
    %v900 = vld [vmem:[%s892 + $0x38] sm:$0xff]
    %v901 = vld [vmem:[%s892 + $0x40] sm:$0xff]
    %v902 = vld [vmem:[%s892 + $0x48] sm:$0xff]
    %v903 = vld [vmem:[%s892 + $0x50] sm:$0xff]
    %v904 = vld [vmem:[%s892 + $0x58] sm:$0xff]
    %905 = vmatprep.subr.mxu0 0.0
    %906 = vmatpush1.msra.mxu0 %v893
    %907 = vmatprep.subr.mxu0 0.0
    %908 = vmatpush1.msra.mxu0 %v894
    %909 = vmatprep.subr.mxu0 0.0
    %910 = vmatpush1.msra.mxu0 %v895
    %911 = vmatprep.subr.mxu0 0.0
    %912 = vmatpush1.msra.mxu0 %v896
    %913 = vmatprep.subr.mxu0 0.0
    %914 = vmatpush1.msra.mxu0 %v897
    %915 = vmatprep.subr.mxu0 0.0
    %916 = vmatpush1.msra.mxu0 %v898
    %917 = vmatprep.subr.mxu0 0.0
    %918 = vmatpush1.msra.mxu0 %v899
    %919 = vmatprep.subr.mxu0 0.0
    %920 = vmatpush1.msra.mxu0 %v900
    %921 = vmatprep.subr.mxu0 0.0
    %922 = vmatpush1.msra.mxu0 %v901
    %923 = vmatprep.subr.mxu0 0.0
    %924 = vmatpush1.msra.mxu0 %v902
    %925 = vmatprep.subr.mxu0 0.0
    %926 = vmatpush1.msra.mxu0 %v903
    %927 = vmatprep.subr.mxu0 0.0
    %928 = vmatpush1.msra.mxu0 %v904
    %929 = vmatprep.subr.mxu0 0.0
    %930 = vmatpush1.msra.mxu0 0.0
    %931 = vmatprep.subr.mxu0 0.0
    %932 = vmatpush1.msra.mxu0 0.0
    %933 = vmatprep.subr.mxu0 0.0
    %934 = vmatpush1.msra.mxu0 0.0
    %935 = vmatprep.subr.mxu0 0.0
    %936 = vmatpush1.msra.mxu0 0.0
    %937 = vmatprep.subr.mxu0 0.0
    %938 = vmatpush1.msra.mxu0 0.0
    %939 = vmatprep.subr.mxu0 0.0
    %940 = vmatpush1.msra.mxu0 0.0
    %941 = vmatprep.subr.mxu0 0.0
    %942 = vmatpush1.msra.mxu0 0.0
    %943 = vmatprep.subr.mxu0 0.0
    %944 = vmatpush1.msra.mxu0 0.0
    %945 = vmatprep.subr.mxu0 0.0
    %946 = vmatpush1.msra.mxu0 0.0
    %947 = vmatprep.subr.mxu0 0.0
    %948 = vmatpush1.msra.mxu0 0.0
    %949 = vmatprep.subr.mxu0 0.0
    %950 = vmatpush1.msra.mxu0 0.0
    %951 = vmatprep.subr.mxu0 0.0
    %952 = vmatpush1.msra.mxu0 0.0
    %953 = vmatprep.subr.mxu0 0.0
    %954 = vmatpush1.msra.mxu0 0.0
    %955 = vmatprep.subr.mxu0 0.0
    %956 = vmatpush1.msra.mxu0 0.0
    %957 = vmatprep.subr.mxu0 0.0
    %958 = vmatpush1.msra.mxu0 0.0
    %959 = vmatprep.subr.mxu0 0.0
    %960 = vmatpush1.msra.mxu0 0.0
    %961 = vmatprep.subr.mxu0 0.0
    %962 = vmatpush1.msra.mxu0 0.0
    %963 = vmatprep.subr.mxu0 0.0
    %964 = vmatpush1.msra.mxu0 0.0
    %965 = vmatprep.subr.mxu0 0.0
    %966 = vmatpush1.msra.mxu0 0.0
    %967 = vmatprep.subr.mxu0 0.0
    %968 = vmatpush1.msra.mxu0 0.0
    %969 = vmatprep.mubr.f32.mxu0 0.0
    %970 = vmatmul.mubr.f32.gmra.mrb[0].mxu0 %v56
    %v971 = vpop.f32.mrb[0].mxu0
    %v972 = vadd.f32 0.0, %v971
    %v973 = vpop.f32.mrb[0].mxu0
    %974 = vdwg.mxu0
    %v975 = vmul.f32 %v972, %v972
    %976 = vadd.xlane.f32.xlu0 %v975
    %v977 = vpop.xlane.xlu0 %976
    %v978 = vmul.f32 %v893, %v893
    %v979 = vmul.f32 %v894, %v894
    %v980 = vmul.f32 %v895, %v895
    %v981 = vmul.f32 %v896, %v896
    %v982 = vmul.f32 %v897, %v897
    %v983 = vmul.f32 %v898, %v898
    %v984 = vmul.f32 %v899, %v899
    %v985 = vmul.f32 %v900, %v900
    %v986 = vmul.f32 %v901, %v901
    %v987 = vmul.f32 %v902, %v902
    %v988 = vmul.f32 %v903, %v903
    %v989 = vmul.f32 %v904, %v904
    %990 = vmatprep.subr.mxu0 0.0
    %991 = vmatpush1.xpose.msra.mxu0 %v978
    %992 = vmatprep.subr.mxu0 0.0
    %993 = vmatpush1.xpose.msra.mxu0 %v979
    %994 = vmatprep.subr.mxu0 0.0
    %995 = vmatpush1.xpose.msra.mxu0 %v980
    %996 = vmatprep.subr.mxu0 0.0
    %997 = vmatpush1.xpose.msra.mxu0 %v981
    %998 = vmatprep.subr.mxu0 0.0
    %999 = vmatpush1.xpose.msra.mxu0 %v982
    %1000 = vmatprep.subr.mxu0 0.0
    %1001 = vmatpush1.xpose.msra.mxu0 %v983
    %1002 = vmatprep.subr.mxu0 0.0
    %1003 = vmatpush1.xpose.msra.mxu0 %v984
    %1004 = vmatprep.subr.mxu0 0.0
    %1005 = vmatpush1.xpose.msra.mxu0 %v985
    %1006 = vmatprep.subr.mxu0 0.0
    %1007 = vmatpush1.xpose.msra.mxu0 %v986
    %1008 = vmatprep.subr.mxu0 0.0
    %1009 = vmatpush1.xpose.msra.mxu0 %v987
    %1010 = vmatprep.subr.mxu0 0.0
    %1011 = vmatpush1.xpose.msra.mxu0 %v988
    %1012 = vmatprep.subr.mxu0 0.0
    %1013 = vmatpush1.xpose.msra.mxu0 %v989
    %1014 = vmatprep.subr.mxu0 0.0
    %1015 = vmatpush1.xpose.msra.mxu0 0.0
    %1016 = vmatprep.subr.mxu0 0.0
    %1017 = vmatpush1.xpose.msra.mxu0 0.0
    %1018 = vmatprep.subr.mxu0 0.0
    %1019 = vmatpush1.xpose.msra.mxu0 0.0
    %1020 = vmatprep.subr.mxu0 0.0
    %1021 = vmatpush1.xpose.msra.mxu0 0.0
    %1022 = vmatprep.subr.mxu0 0.0
    %1023 = vmatpush1.xpose.msra.mxu0 0.0
    %1024 = vmatprep.subr.mxu0 0.0
    %1025 = vmatpush1.xpose.msra.mxu0 0.0
    %1026 = vmatprep.subr.mxu0 0.0
    %1027 = vmatpush1.xpose.msra.mxu0 0.0
    %1028 = vmatprep.subr.mxu0 0.0
    %1029 = vmatpush1.xpose.msra.mxu0 0.0
    %1030 = vmatprep.subr.mxu0 0.0
    %1031 = vmatpush1.xpose.msra.mxu0 0.0
    %1032 = vmatprep.subr.mxu0 0.0
    %1033 = vmatpush1.xpose.msra.mxu0 0.0
    %1034 = vmatprep.subr.mxu0 0.0
    %1035 = vmatpush1.xpose.msra.mxu0 0.0
    %1036 = vmatprep.subr.mxu0 0.0
    %1037 = vmatpush1.xpose.msra.mxu0 0.0
    %1038 = vmatprep.subr.mxu0 0.0
    %1039 = vmatpush1.xpose.msra.mxu0 0.0
    %1040 = vmatprep.subr.mxu0 0.0
    %1041 = vmatpush1.xpose.msra.mxu0 0.0
    %1042 = vmatprep.subr.mxu0 0.0
    %1043 = vmatpush1.xpose.msra.mxu0 0.0
    %1044 = vmatprep.subr.mxu0 0.0
    %1045 = vmatpush1.xpose.msra.mxu0 0.0
    %1046 = vmatprep.subr.mxu0 0.0
    %1047 = vmatpush1.xpose.msra.mxu0 0.0
    %1048 = vmatprep.subr.mxu0 0.0
    %1049 = vmatpush1.xpose.msra.mxu0 0.0
    %1050 = vmatprep.subr.mxu0 0.0
    %1051 = vmatpush1.xpose.msra.mxu0 0.0
    %1052 = vmatprep.subr.mxu0 0.0
    %1053 = vmatpush1.xpose.msra.mxu0 0.0
    %1054 = vmatprep.mubr.f32.mxu0 0.0
    %1055 = vmatmul.mubr.f32.gmra.mrb[0].mxu0 1.0
    %v1056 = vpop.f32.mrb[0].mxu0
    %v1057 = vadd.f32 0.0, %v1056
    %v1058 = vpop.f32.mrb[0].mxu0
    %1059 = vdwg.mxu0
    %1060 = vmatprep.subr.mxu0 0.0
    %1061 = vmatpush1.xpose.msra.mxu0 %v893
    %1062 = vmatprep.subr.mxu0 0.0
    %1063 = vmatpush1.xpose.msra.mxu0 %v894
    %1064 = vmatprep.subr.mxu0 0.0
    %1065 = vmatpush1.xpose.msra.mxu0 %v895
    %1066 = vmatprep.subr.mxu0 0.0
    %1067 = vmatpush1.xpose.msra.mxu0 %v896
    %1068 = vmatprep.subr.mxu0 0.0
    %1069 = vmatpush1.xpose.msra.mxu0 %v897
    %1070 = vmatprep.subr.mxu0 0.0
    %1071 = vmatpush1.xpose.msra.mxu0 %v898
    %1072 = vmatprep.subr.mxu0 0.0
    %1073 = vmatpush1.xpose.msra.mxu0 %v899
    %1074 = vmatprep.subr.mxu0 0.0
    %1075 = vmatpush1.xpose.msra.mxu0 %v900
    %1076 = vmatprep.subr.mxu0 0.0
    %1077 = vmatpush1.xpose.msra.mxu0 %v901
    %1078 = vmatprep.subr.mxu0 0.0
    %1079 = vmatpush1.xpose.msra.mxu0 %v902
    %1080 = vmatprep.subr.mxu0 0.0
    %1081 = vmatpush1.xpose.msra.mxu0 %v903
    %1082 = vmatprep.subr.mxu0 0.0
    %1083 = vmatpush1.xpose.msra.mxu0 %v904
    %1084 = vmatprep.subr.mxu0 0.0
    %1085 = vmatpush1.xpose.msra.mxu0 0.0
    %1086 = vmatprep.subr.mxu0 0.0
    %1087 = vmatpush1.xpose.msra.mxu0 0.0
    %1088 = vmatprep.subr.mxu0 0.0
    %1089 = vmatpush1.xpose.msra.mxu0 0.0
    %1090 = vmatprep.subr.mxu0 0.0
    %1091 = vmatpush1.xpose.msra.mxu0 0.0
    %1092 = vmatprep.subr.mxu0 0.0
    %1093 = vmatpush1.xpose.msra.mxu0 0.0
    %1094 = vmatprep.subr.mxu0 0.0
    %1095 = vmatpush1.xpose.msra.mxu0 0.0
    %1096 = vmatprep.subr.mxu0 0.0
    %1097 = vmatpush1.xpose.msra.mxu0 0.0
    %1098 = vmatprep.subr.mxu0 0.0
    %1099 = vmatpush1.xpose.msra.mxu0 0.0
    %1100 = vmatprep.subr.mxu0 0.0
    %1101 = vmatpush1.xpose.msra.mxu0 0.0
    %1102 = vmatprep.subr.mxu0 0.0
    %1103 = vmatpush1.xpose.msra.mxu0 0.0
    %1104 = vmatprep.subr.mxu0 0.0
    %1105 = vmatpush1.xpose.msra.mxu0 0.0
    %1106 = vmatprep.subr.mxu0 0.0
    %1107 = vmatpush1.xpose.msra.mxu0 0.0
    %1108 = vmatprep.subr.mxu0 0.0
    %1109 = vmatpush1.xpose.msra.mxu0 0.0
    %1110 = vmatprep.subr.mxu0 0.0
    %1111 = vmatpush1.xpose.msra.mxu0 0.0
    %1112 = vmatprep.subr.mxu0 0.0
    %1113 = vmatpush1.xpose.msra.mxu0 0.0
    %1114 = vmatprep.subr.mxu0 0.0
    %1115 = vmatpush1.xpose.msra.mxu0 0.0
    %1116 = vmatprep.subr.mxu0 0.0
    %1117 = vmatpush1.xpose.msra.mxu0 0.0
    %1118 = vmatprep.subr.mxu0 0.0
    %1119 = vmatpush1.xpose.msra.mxu0 0.0
    %1120 = vmatprep.subr.mxu0 0.0
    %1121 = vmatpush1.xpose.msra.mxu0 0.0
    %1122 = vmatprep.subr.mxu0 0.0
    %1123 = vmatpush1.xpose.msra.mxu0 0.0
    %1124 = vmatprep.mubr.f32.mxu0 0.0
    %1125 = vmatmul.mubr.f32.gmra.mrb[0].mxu0 %v972
    %v1126 = vpop.f32.mrb[0].mxu0
    %v1127 = vadd.f32 0.0, %v1126
    %v1128 = vpop.f32.mrb[0].mxu0
    %1129 = vdwg.mxu0
    %v1130 = vlaneseq
    %v1131 = vshrl.u32 %v1130, 7
    %v1132 = vsub.s32 0, %v1131
    %v1133 = vrot.slane %v1057, %v1132
    %v1134 = vadd.f32 %v977, %v1133
    %v1135 = vmul.f32 %v1127, 2.0
    %v1136 = vsub.f32 %v1134, %v1135
    %v1137 = vmax.f32 %v1136, 1e-12
    %v1138 = vrsqrt.pop %v1137
    %v1139 = vmul.f32 %v1137, %v1138
    %vm1140 = vcmp.eq.f32.partialorder %v1137, inf
    %v1141 = vsel %vm1140, %v1137, %v1139
    %vm1142 = vcmp.eq.f32.partialorder %v1137, 0.0
    %v1143 = vand.u32 %v1137, 2147483648
    %v1144 = vsel %vm1142, %v1143, %v1141
    %v1145 = vmul.f32 %v1144, %v40
    %v1146 = vsel %vm54, %v1145, 0.0
    %1147 = vadd.xlane.f32.xlu0 %v1146
    %v1148 = vpop.xlane.xlu0 %1147
    %v1149 = vrot.slane %v1148, 4
    %v1150 = vadd.f32 %v1148, %v1149
    %v1151 = vrot.slane %v1150, 2
    %v1152 = vadd.f32 %v1150, %v1151
    %v1153 = vrot.slane %v1152, 1
    %v1154 = vadd.f32 %v1152, %v1153
    %s1155 = vtos %v1154
    %s1156 = smul.f32 %s1155, 0.010416667
    %v1157 = vsub.f32 0.6, %v1144
    %v1158 = vmax.f32 %v1157, 0.0
    %v1159 = vmul.f32 %v1158, %v312
    %v1160 = vsel %vm54, %v1159, 0.0
    %1161 = vadd.xlane.f32.xlu0 %v1160
    %v1162 = vpop.xlane.xlu0 %1161
    %v1163 = vrot.slane %v1162, 4
    %v1164 = vadd.f32 %v1162, %v1163
    %v1165 = vrot.slane %v1164, 2
    %v1166 = vadd.f32 %v1164, %v1165
    %v1167 = vrot.slane %v1166, 1
    %v1168 = vadd.f32 %v1166, %v1167
    %s1169 = vtos %v1168
    %s1170 = smul.f32 %s1169, 0.0014880953
    %s1171 = sadd.f32 %s1156, %s1170
    %v1172 = vstv %s1171
    %1173 = vst [vmem:[#allocation5 + $0x3] sm:$0x1] %v1172
    %s1174 = scalar_lea.vmem [#allocation2], 384
    %v1175 = vld [vmem:[%s1174] sm:$0xff]
    %v1176 = vld [vmem:[%s1174 + $0x8] sm:$0xff]
    %v1177 = vld [vmem:[%s1174 + $0x10] sm:$0xff]
    %v1178 = vld [vmem:[%s1174 + $0x18] sm:$0xff]
    %v1179 = vld [vmem:[%s1174 + $0x20] sm:$0xff]
    %v1180 = vld [vmem:[%s1174 + $0x28] sm:$0xff]
    %v1181 = vld [vmem:[%s1174 + $0x30] sm:$0xff]
    %v1182 = vld [vmem:[%s1174 + $0x38] sm:$0xff]
    %v1183 = vld [vmem:[%s1174 + $0x40] sm:$0xff]
    %v1184 = vld [vmem:[%s1174 + $0x48] sm:$0xff]
    %v1185 = vld [vmem:[%s1174 + $0x50] sm:$0xff]
    %v1186 = vld [vmem:[%s1174 + $0x58] sm:$0xff]
    %1187 = vmatprep.subr.mxu0 0.0
    %1188 = vmatpush1.msra.mxu0 %v1175
    %1189 = vmatprep.subr.mxu0 0.0
    %1190 = vmatpush1.msra.mxu0 %v1176
    %1191 = vmatprep.subr.mxu0 0.0
    %1192 = vmatpush1.msra.mxu0 %v1177
    %1193 = vmatprep.subr.mxu0 0.0
    %1194 = vmatpush1.msra.mxu0 %v1178
    %1195 = vmatprep.subr.mxu0 0.0
    %1196 = vmatpush1.msra.mxu0 %v1179
    %1197 = vmatprep.subr.mxu0 0.0
    %1198 = vmatpush1.msra.mxu0 %v1180
    %1199 = vmatprep.subr.mxu0 0.0
    %1200 = vmatpush1.msra.mxu0 %v1181
    %1201 = vmatprep.subr.mxu0 0.0
    %1202 = vmatpush1.msra.mxu0 %v1182
    %1203 = vmatprep.subr.mxu0 0.0
    %1204 = vmatpush1.msra.mxu0 %v1183
    %1205 = vmatprep.subr.mxu0 0.0
    %1206 = vmatpush1.msra.mxu0 %v1184
    %1207 = vmatprep.subr.mxu0 0.0
    %1208 = vmatpush1.msra.mxu0 %v1185
    %1209 = vmatprep.subr.mxu0 0.0
    %1210 = vmatpush1.msra.mxu0 %v1186
    %1211 = vmatprep.subr.mxu0 0.0
    %1212 = vmatpush1.msra.mxu0 0.0
    %1213 = vmatprep.subr.mxu0 0.0
    %1214 = vmatpush1.msra.mxu0 0.0
    %1215 = vmatprep.subr.mxu0 0.0
    %1216 = vmatpush1.msra.mxu0 0.0
    %1217 = vmatprep.subr.mxu0 0.0
    %1218 = vmatpush1.msra.mxu0 0.0
    %1219 = vmatprep.subr.mxu0 0.0
    %1220 = vmatpush1.msra.mxu0 0.0
    %1221 = vmatprep.subr.mxu0 0.0
    %1222 = vmatpush1.msra.mxu0 0.0
    %1223 = vmatprep.subr.mxu0 0.0
    %1224 = vmatpush1.msra.mxu0 0.0
    %1225 = vmatprep.subr.mxu0 0.0
    %1226 = vmatpush1.msra.mxu0 0.0
    %1227 = vmatprep.subr.mxu0 0.0
    %1228 = vmatpush1.msra.mxu0 0.0
    %1229 = vmatprep.subr.mxu0 0.0
    %1230 = vmatpush1.msra.mxu0 0.0
    %1231 = vmatprep.subr.mxu0 0.0
    %1232 = vmatpush1.msra.mxu0 0.0
    %1233 = vmatprep.subr.mxu0 0.0
    %1234 = vmatpush1.msra.mxu0 0.0
    %1235 = vmatprep.subr.mxu0 0.0
    %1236 = vmatpush1.msra.mxu0 0.0
    %1237 = vmatprep.subr.mxu0 0.0
    %1238 = vmatpush1.msra.mxu0 0.0
    %1239 = vmatprep.subr.mxu0 0.0
    %1240 = vmatpush1.msra.mxu0 0.0
    %1241 = vmatprep.subr.mxu0 0.0
    %1242 = vmatpush1.msra.mxu0 0.0
    %1243 = vmatprep.subr.mxu0 0.0
    %1244 = vmatpush1.msra.mxu0 0.0
    %1245 = vmatprep.subr.mxu0 0.0
    %1246 = vmatpush1.msra.mxu0 0.0
    %1247 = vmatprep.subr.mxu0 0.0
    %1248 = vmatpush1.msra.mxu0 0.0
    %1249 = vmatprep.subr.mxu0 0.0
    %1250 = vmatpush1.msra.mxu0 0.0
    %1251 = vmatprep.mubr.f32.mxu0 0.0
    %1252 = vmatmul.mubr.f32.gmra.mrb[0].mxu0 %v56
    %v1253 = vpop.f32.mrb[0].mxu0
    %v1254 = vadd.f32 0.0, %v1253
    %v1255 = vpop.f32.mrb[0].mxu0
    %1256 = vdwg.mxu0
    %v1257 = vmul.f32 %v1254, %v1254
    %1258 = vadd.xlane.f32.xlu0 %v1257
    %v1259 = vpop.xlane.xlu0 %1258
    %v1260 = vmul.f32 %v1175, %v1175
    %v1261 = vmul.f32 %v1176, %v1176
    %v1262 = vmul.f32 %v1177, %v1177
    %v1263 = vmul.f32 %v1178, %v1178
    %v1264 = vmul.f32 %v1179, %v1179
    %v1265 = vmul.f32 %v1180, %v1180
    %v1266 = vmul.f32 %v1181, %v1181
    %v1267 = vmul.f32 %v1182, %v1182
    %v1268 = vmul.f32 %v1183, %v1183
    %v1269 = vmul.f32 %v1184, %v1184
    %v1270 = vmul.f32 %v1185, %v1185
    %v1271 = vmul.f32 %v1186, %v1186
    %1272 = vmatprep.subr.mxu0 0.0
    %1273 = vmatpush1.xpose.msra.mxu0 %v1260
    %1274 = vmatprep.subr.mxu0 0.0
    %1275 = vmatpush1.xpose.msra.mxu0 %v1261
    %1276 = vmatprep.subr.mxu0 0.0
    %1277 = vmatpush1.xpose.msra.mxu0 %v1262
    %1278 = vmatprep.subr.mxu0 0.0
    %1279 = vmatpush1.xpose.msra.mxu0 %v1263
    %1280 = vmatprep.subr.mxu0 0.0
    %1281 = vmatpush1.xpose.msra.mxu0 %v1264
    %1282 = vmatprep.subr.mxu0 0.0
    %1283 = vmatpush1.xpose.msra.mxu0 %v1265
    %1284 = vmatprep.subr.mxu0 0.0
    %1285 = vmatpush1.xpose.msra.mxu0 %v1266
    %1286 = vmatprep.subr.mxu0 0.0
    %1287 = vmatpush1.xpose.msra.mxu0 %v1267
    %1288 = vmatprep.subr.mxu0 0.0
    %1289 = vmatpush1.xpose.msra.mxu0 %v1268
    %1290 = vmatprep.subr.mxu0 0.0
    %1291 = vmatpush1.xpose.msra.mxu0 %v1269
    %1292 = vmatprep.subr.mxu0 0.0
    %1293 = vmatpush1.xpose.msra.mxu0 %v1270
    %1294 = vmatprep.subr.mxu0 0.0
    %1295 = vmatpush1.xpose.msra.mxu0 %v1271
    %1296 = vmatprep.subr.mxu0 0.0
    %1297 = vmatpush1.xpose.msra.mxu0 0.0
    %1298 = vmatprep.subr.mxu0 0.0
    %1299 = vmatpush1.xpose.msra.mxu0 0.0
    %1300 = vmatprep.subr.mxu0 0.0
    %1301 = vmatpush1.xpose.msra.mxu0 0.0
    %1302 = vmatprep.subr.mxu0 0.0
    %1303 = vmatpush1.xpose.msra.mxu0 0.0
    %1304 = vmatprep.subr.mxu0 0.0
    %1305 = vmatpush1.xpose.msra.mxu0 0.0
    %1306 = vmatprep.subr.mxu0 0.0
    %1307 = vmatpush1.xpose.msra.mxu0 0.0
    %1308 = vmatprep.subr.mxu0 0.0
    %1309 = vmatpush1.xpose.msra.mxu0 0.0
    %1310 = vmatprep.subr.mxu0 0.0
    %1311 = vmatpush1.xpose.msra.mxu0 0.0
    %1312 = vmatprep.subr.mxu0 0.0
    %1313 = vmatpush1.xpose.msra.mxu0 0.0
    %1314 = vmatprep.subr.mxu0 0.0
    %1315 = vmatpush1.xpose.msra.mxu0 0.0
    %1316 = vmatprep.subr.mxu0 0.0
    %1317 = vmatpush1.xpose.msra.mxu0 0.0
    %1318 = vmatprep.subr.mxu0 0.0
    %1319 = vmatpush1.xpose.msra.mxu0 0.0
    %1320 = vmatprep.subr.mxu0 0.0
    %1321 = vmatpush1.xpose.msra.mxu0 0.0
    %1322 = vmatprep.subr.mxu0 0.0
    %1323 = vmatpush1.xpose.msra.mxu0 0.0
    %1324 = vmatprep.subr.mxu0 0.0
    %1325 = vmatpush1.xpose.msra.mxu0 0.0
    %1326 = vmatprep.subr.mxu0 0.0
    %1327 = vmatpush1.xpose.msra.mxu0 0.0
    %1328 = vmatprep.subr.mxu0 0.0
    %1329 = vmatpush1.xpose.msra.mxu0 0.0
    %1330 = vmatprep.subr.mxu0 0.0
    %1331 = vmatpush1.xpose.msra.mxu0 0.0
    %1332 = vmatprep.subr.mxu0 0.0
    %1333 = vmatpush1.xpose.msra.mxu0 0.0
    %1334 = vmatprep.subr.mxu0 0.0
    %1335 = vmatpush1.xpose.msra.mxu0 0.0
    %1336 = vmatprep.mubr.f32.mxu0 0.0
    %1337 = vmatmul.mubr.f32.gmra.mrb[0].mxu0 1.0
    %v1338 = vpop.f32.mrb[0].mxu0
    %v1339 = vadd.f32 0.0, %v1338
    %v1340 = vpop.f32.mrb[0].mxu0
    %1341 = vdwg.mxu0
    %1342 = vmatprep.subr.mxu0 0.0
    %1343 = vmatpush1.xpose.msra.mxu0 %v1175
    %1344 = vmatprep.subr.mxu0 0.0
    %1345 = vmatpush1.xpose.msra.mxu0 %v1176
    %1346 = vmatprep.subr.mxu0 0.0
    %1347 = vmatpush1.xpose.msra.mxu0 %v1177
    %1348 = vmatprep.subr.mxu0 0.0
    %1349 = vmatpush1.xpose.msra.mxu0 %v1178
    %1350 = vmatprep.subr.mxu0 0.0
    %1351 = vmatpush1.xpose.msra.mxu0 %v1179
    %1352 = vmatprep.subr.mxu0 0.0
    %1353 = vmatpush1.xpose.msra.mxu0 %v1180
    %1354 = vmatprep.subr.mxu0 0.0
    %1355 = vmatpush1.xpose.msra.mxu0 %v1181
    %1356 = vmatprep.subr.mxu0 0.0
    %1357 = vmatpush1.xpose.msra.mxu0 %v1182
    %1358 = vmatprep.subr.mxu0 0.0
    %1359 = vmatpush1.xpose.msra.mxu0 %v1183
    %1360 = vmatprep.subr.mxu0 0.0
    %1361 = vmatpush1.xpose.msra.mxu0 %v1184
    %1362 = vmatprep.subr.mxu0 0.0
    %1363 = vmatpush1.xpose.msra.mxu0 %v1185
    %1364 = vmatprep.subr.mxu0 0.0
    %1365 = vmatpush1.xpose.msra.mxu0 %v1186
    %1366 = vmatprep.subr.mxu0 0.0
    %1367 = vmatpush1.xpose.msra.mxu0 0.0
    %1368 = vmatprep.subr.mxu0 0.0
    %1369 = vmatpush1.xpose.msra.mxu0 0.0
    %1370 = vmatprep.subr.mxu0 0.0
    %1371 = vmatpush1.xpose.msra.mxu0 0.0
    %1372 = vmatprep.subr.mxu0 0.0
    %1373 = vmatpush1.xpose.msra.mxu0 0.0
    %1374 = vmatprep.subr.mxu0 0.0
    %1375 = vmatpush1.xpose.msra.mxu0 0.0
    %1376 = vmatprep.subr.mxu0 0.0
    %1377 = vmatpush1.xpose.msra.mxu0 0.0
    %1378 = vmatprep.subr.mxu0 0.0
    %1379 = vmatpush1.xpose.msra.mxu0 0.0
    %1380 = vmatprep.subr.mxu0 0.0
    %1381 = vmatpush1.xpose.msra.mxu0 0.0
    %1382 = vmatprep.subr.mxu0 0.0
    %1383 = vmatpush1.xpose.msra.mxu0 0.0
    %1384 = vmatprep.subr.mxu0 0.0
    %1385 = vmatpush1.xpose.msra.mxu0 0.0
    %1386 = vmatprep.subr.mxu0 0.0
    %1387 = vmatpush1.xpose.msra.mxu0 0.0
    %1388 = vmatprep.subr.mxu0 0.0
    %1389 = vmatpush1.xpose.msra.mxu0 0.0
    %1390 = vmatprep.subr.mxu0 0.0
    %1391 = vmatpush1.xpose.msra.mxu0 0.0
    %1392 = vmatprep.subr.mxu0 0.0
    %1393 = vmatpush1.xpose.msra.mxu0 0.0
    %1394 = vmatprep.subr.mxu0 0.0
    %1395 = vmatpush1.xpose.msra.mxu0 0.0
    %1396 = vmatprep.subr.mxu0 0.0
    %1397 = vmatpush1.xpose.msra.mxu0 0.0
    %1398 = vmatprep.subr.mxu0 0.0
    %1399 = vmatpush1.xpose.msra.mxu0 0.0
    %1400 = vmatprep.subr.mxu0 0.0
    %1401 = vmatpush1.xpose.msra.mxu0 0.0
    %1402 = vmatprep.subr.mxu0 0.0
    %1403 = vmatpush1.xpose.msra.mxu0 0.0
    %1404 = vmatprep.subr.mxu0 0.0
    %1405 = vmatpush1.xpose.msra.mxu0 0.0
    %1406 = vmatprep.mubr.f32.mxu0 0.0
    %1407 = vmatmul.mubr.f32.gmra.mrb[0].mxu0 %v1254
    %v1408 = vpop.f32.mrb[0].mxu0
    %v1409 = vadd.f32 0.0, %v1408
    %v1410 = vpop.f32.mrb[0].mxu0
    %1411 = vdwg.mxu0
    %v1412 = vlaneseq
    %v1413 = vshrl.u32 %v1412, 7
    %v1414 = vsub.s32 0, %v1413
    %v1415 = vrot.slane %v1339, %v1414
    %v1416 = vadd.f32 %v1259, %v1415
    %v1417 = vmul.f32 %v1409, 2.0
    %v1418 = vsub.f32 %v1416, %v1417
    %v1419 = vmax.f32 %v1418, 1e-12
    %v1420 = vrsqrt.pop %v1419
    %v1421 = vmul.f32 %v1419, %v1420
    %vm1422 = vcmp.eq.f32.partialorder %v1419, inf
    %v1423 = vsel %vm1422, %v1419, %v1421
    %vm1424 = vcmp.eq.f32.partialorder %v1419, 0.0
    %v1425 = vand.u32 %v1419, 2147483648
    %v1426 = vsel %vm1424, %v1425, %v1423
    %v1427 = vmul.f32 %v1426, %v40
    %v1428 = vsel %vm54, %v1427, 0.0
    %1429 = vadd.xlane.f32.xlu0 %v1428
    %v1430 = vpop.xlane.xlu0 %1429
    %v1431 = vrot.slane %v1430, 4
    %v1432 = vadd.f32 %v1430, %v1431
    %v1433 = vrot.slane %v1432, 2
    %v1434 = vadd.f32 %v1432, %v1433
    %v1435 = vrot.slane %v1434, 1
    %v1436 = vadd.f32 %v1434, %v1435
    %s1437 = vtos %v1436
    %s1438 = smul.f32 %s1437, 0.010416667
    %v1439 = vsub.f32 0.6, %v1426
    %v1440 = vmax.f32 %v1439, 0.0
    %v1441 = vmul.f32 %v1440, %v312
    %v1442 = vsel %vm54, %v1441, 0.0
    %1443 = vadd.xlane.f32.xlu0 %v1442
    %v1444 = vpop.xlane.xlu0 %1443
    %v1445 = vrot.slane %v1444, 4
    %v1446 = vadd.f32 %v1444, %v1445
    %v1447 = vrot.slane %v1446, 2
    %v1448 = vadd.f32 %v1446, %v1447
    %v1449 = vrot.slane %v1448, 1
    %v1450 = vadd.f32 %v1448, %v1449
    %s1451 = vtos %v1450
    %s1452 = smul.f32 %s1451, 0.0014880953
    %s1453 = sadd.f32 %s1438, %s1452
    %v1454 = vstv %s1453
    %1455 = vst [vmem:[#allocation5 + $0x4] sm:$0x1] %v1454
    %s1456 = scalar_lea.vmem [#allocation2], 480
    %v1457 = vld [vmem:[%s1456] sm:$0xff]
    %v1458 = vld [vmem:[%s1456 + $0x8] sm:$0xff]
    %v1459 = vld [vmem:[%s1456 + $0x10] sm:$0xff]
    %v1460 = vld [vmem:[%s1456 + $0x18] sm:$0xff]
    %v1461 = vld [vmem:[%s1456 + $0x20] sm:$0xff]
    %v1462 = vld [vmem:[%s1456 + $0x28] sm:$0xff]
    %v1463 = vld [vmem:[%s1456 + $0x30] sm:$0xff]
    %v1464 = vld [vmem:[%s1456 + $0x38] sm:$0xff]
    %v1465 = vld [vmem:[%s1456 + $0x40] sm:$0xff]
    %v1466 = vld [vmem:[%s1456 + $0x48] sm:$0xff]
    %v1467 = vld [vmem:[%s1456 + $0x50] sm:$0xff]
    %v1468 = vld [vmem:[%s1456 + $0x58] sm:$0xff]
    %1469 = vmatprep.subr.mxu0 0.0
    %1470 = vmatpush1.msra.mxu0 %v1457
    %1471 = vmatprep.subr.mxu0 0.0
    %1472 = vmatpush1.msra.mxu0 %v1458
    %1473 = vmatprep.subr.mxu0 0.0
    %1474 = vmatpush1.msra.mxu0 %v1459
    %1475 = vmatprep.subr.mxu0 0.0
    %1476 = vmatpush1.msra.mxu0 %v1460
    %1477 = vmatprep.subr.mxu0 0.0
    %1478 = vmatpush1.msra.mxu0 %v1461
    %1479 = vmatprep.subr.mxu0 0.0
    %1480 = vmatpush1.msra.mxu0 %v1462
    %1481 = vmatprep.subr.mxu0 0.0
    %1482 = vmatpush1.msra.mxu0 %v1463
    %1483 = vmatprep.subr.mxu0 0.0
    %1484 = vmatpush1.msra.mxu0 %v1464
    %1485 = vmatprep.subr.mxu0 0.0
    %1486 = vmatpush1.msra.mxu0 %v1465
    %1487 = vmatprep.subr.mxu0 0.0
    %1488 = vmatpush1.msra.mxu0 %v1466
    %1489 = vmatprep.subr.mxu0 0.0
    %1490 = vmatpush1.msra.mxu0 %v1467
    %1491 = vmatprep.subr.mxu0 0.0
    %1492 = vmatpush1.msra.mxu0 %v1468
    %1493 = vmatprep.subr.mxu0 0.0
    %1494 = vmatpush1.msra.mxu0 0.0
    %1495 = vmatprep.subr.mxu0 0.0
    %1496 = vmatpush1.msra.mxu0 0.0
    %1497 = vmatprep.subr.mxu0 0.0
    %1498 = vmatpush1.msra.mxu0 0.0
    %1499 = vmatprep.subr.mxu0 0.0
    %1500 = vmatpush1.msra.mxu0 0.0
    %1501 = vmatprep.subr.mxu0 0.0
    %1502 = vmatpush1.msra.mxu0 0.0
    %1503 = vmatprep.subr.mxu0 0.0
    %1504 = vmatpush1.msra.mxu0 0.0
    %1505 = vmatprep.subr.mxu0 0.0
    %1506 = vmatpush1.msra.mxu0 0.0
    %1507 = vmatprep.subr.mxu0 0.0
    %1508 = vmatpush1.msra.mxu0 0.0
    %1509 = vmatprep.subr.mxu0 0.0
    %1510 = vmatpush1.msra.mxu0 0.0
    %1511 = vmatprep.subr.mxu0 0.0
    %1512 = vmatpush1.msra.mxu0 0.0
    %1513 = vmatprep.subr.mxu0 0.0
    %1514 = vmatpush1.msra.mxu0 0.0
    %1515 = vmatprep.subr.mxu0 0.0
    %1516 = vmatpush1.msra.mxu0 0.0
    %1517 = vmatprep.subr.mxu0 0.0
    %1518 = vmatpush1.msra.mxu0 0.0
    %1519 = vmatprep.subr.mxu0 0.0
    %1520 = vmatpush1.msra.mxu0 0.0
    %1521 = vmatprep.subr.mxu0 0.0
    %1522 = vmatpush1.msra.mxu0 0.0
    %1523 = vmatprep.subr.mxu0 0.0
    %1524 = vmatpush1.msra.mxu0 0.0
    %1525 = vmatprep.subr.mxu0 0.0
    %1526 = vmatpush1.msra.mxu0 0.0
    %1527 = vmatprep.subr.mxu0 0.0
    %1528 = vmatpush1.msra.mxu0 0.0
    %1529 = vmatprep.subr.mxu0 0.0
    %1530 = vmatpush1.msra.mxu0 0.0
    %1531 = vmatprep.subr.mxu0 0.0
    %1532 = vmatpush1.msra.mxu0 0.0
    %1533 = vmatprep.mubr.f32.mxu0 0.0
    %1534 = vmatmul.mubr.f32.gmra.mrb[0].mxu0 %v56
    %v1535 = vpop.f32.mrb[0].mxu0
    %v1536 = vadd.f32 0.0, %v1535
    %v1537 = vpop.f32.mrb[0].mxu0
    %1538 = vdwg.mxu0
    %v1539 = vmul.f32 %v1536, %v1536
    %1540 = vadd.xlane.f32.xlu0 %v1539
    %v1541 = vpop.xlane.xlu0 %1540
    %v1542 = vmul.f32 %v1457, %v1457
    %v1543 = vmul.f32 %v1458, %v1458
    %v1544 = vmul.f32 %v1459, %v1459
    %v1545 = vmul.f32 %v1460, %v1460
    %v1546 = vmul.f32 %v1461, %v1461
    %v1547 = vmul.f32 %v1462, %v1462
    %v1548 = vmul.f32 %v1463, %v1463
    %v1549 = vmul.f32 %v1464, %v1464
    %v1550 = vmul.f32 %v1465, %v1465
    %v1551 = vmul.f32 %v1466, %v1466
    %v1552 = vmul.f32 %v1467, %v1467
    %v1553 = vmul.f32 %v1468, %v1468
    %1554 = vmatprep.subr.mxu0 0.0
    %1555 = vmatpush1.xpose.msra.mxu0 %v1542
    %1556 = vmatprep.subr.mxu0 0.0
    %1557 = vmatpush1.xpose.msra.mxu0 %v1543
    %1558 = vmatprep.subr.mxu0 0.0
    %1559 = vmatpush1.xpose.msra.mxu0 %v1544
    %1560 = vmatprep.subr.mxu0 0.0
    %1561 = vmatpush1.xpose.msra.mxu0 %v1545
    %1562 = vmatprep.subr.mxu0 0.0
    %1563 = vmatpush1.xpose.msra.mxu0 %v1546
    %1564 = vmatprep.subr.mxu0 0.0
    %1565 = vmatpush1.xpose.msra.mxu0 %v1547
    %1566 = vmatprep.subr.mxu0 0.0
    %1567 = vmatpush1.xpose.msra.mxu0 %v1548
    %1568 = vmatprep.subr.mxu0 0.0
    %1569 = vmatpush1.xpose.msra.mxu0 %v1549
    %1570 = vmatprep.subr.mxu0 0.0
    %1571 = vmatpush1.xpose.msra.mxu0 %v1550
    %1572 = vmatprep.subr.mxu0 0.0
    %1573 = vmatpush1.xpose.msra.mxu0 %v1551
    %1574 = vmatprep.subr.mxu0 0.0
    %1575 = vmatpush1.xpose.msra.mxu0 %v1552
    %1576 = vmatprep.subr.mxu0 0.0
    %1577 = vmatpush1.xpose.msra.mxu0 %v1553
    %1578 = vmatprep.subr.mxu0 0.0
    %1579 = vmatpush1.xpose.msra.mxu0 0.0
    %1580 = vmatprep.subr.mxu0 0.0
    %1581 = vmatpush1.xpose.msra.mxu0 0.0
    %1582 = vmatprep.subr.mxu0 0.0
    %1583 = vmatpush1.xpose.msra.mxu0 0.0
    %1584 = vmatprep.subr.mxu0 0.0
    %1585 = vmatpush1.xpose.msra.mxu0 0.0
    %1586 = vmatprep.subr.mxu0 0.0
    %1587 = vmatpush1.xpose.msra.mxu0 0.0
    %1588 = vmatprep.subr.mxu0 0.0
    %1589 = vmatpush1.xpose.msra.mxu0 0.0
    %1590 = vmatprep.subr.mxu0 0.0
    %1591 = vmatpush1.xpose.msra.mxu0 0.0
    %1592 = vmatprep.subr.mxu0 0.0
    %1593 = vmatpush1.xpose.msra.mxu0 0.0
    %1594 = vmatprep.subr.mxu0 0.0
    %1595 = vmatpush1.xpose.msra.mxu0 0.0
    %1596 = vmatprep.subr.mxu0 0.0
    %1597 = vmatpush1.xpose.msra.mxu0 0.0
    %1598 = vmatprep.subr.mxu0 0.0
    %1599 = vmatpush1.xpose.msra.mxu0 0.0
    %1600 = vmatprep.subr.mxu0 0.0
    %1601 = vmatpush1.xpose.msra.mxu0 0.0
    %1602 = vmatprep.subr.mxu0 0.0
    %1603 = vmatpush1.xpose.msra.mxu0 0.0
    %1604 = vmatprep.subr.mxu0 0.0
    %1605 = vmatpush1.xpose.msra.mxu0 0.0
    %1606 = vmatprep.subr.mxu0 0.0
    %1607 = vmatpush1.xpose.msra.mxu0 0.0
    %1608 = vmatprep.subr.mxu0 0.0
    %1609 = vmatpush1.xpose.msra.mxu0 0.0
    %1610 = vmatprep.subr.mxu0 0.0
    %1611 = vmatpush1.xpose.msra.mxu0 0.0
    %1612 = vmatprep.subr.mxu0 0.0
    %1613 = vmatpush1.xpose.msra.mxu0 0.0
    %1614 = vmatprep.subr.mxu0 0.0
    %1615 = vmatpush1.xpose.msra.mxu0 0.0
    %1616 = vmatprep.subr.mxu0 0.0
    %1617 = vmatpush1.xpose.msra.mxu0 0.0
    %1618 = vmatprep.mubr.f32.mxu0 0.0
    %1619 = vmatmul.mubr.f32.gmra.mrb[0].mxu0 1.0
    %v1620 = vpop.f32.mrb[0].mxu0
    %v1621 = vadd.f32 0.0, %v1620
    %v1622 = vpop.f32.mrb[0].mxu0
    %1623 = vdwg.mxu0
    %1624 = vmatprep.subr.mxu0 0.0
    %1625 = vmatpush1.xpose.msra.mxu0 %v1457
    %1626 = vmatprep.subr.mxu0 0.0
    %1627 = vmatpush1.xpose.msra.mxu0 %v1458
    %1628 = vmatprep.subr.mxu0 0.0
    %1629 = vmatpush1.xpose.msra.mxu0 %v1459
    %1630 = vmatprep.subr.mxu0 0.0
    %1631 = vmatpush1.xpose.msra.mxu0 %v1460
    %1632 = vmatprep.subr.mxu0 0.0
    %1633 = vmatpush1.xpose.msra.mxu0 %v1461
    %1634 = vmatprep.subr.mxu0 0.0
    %1635 = vmatpush1.xpose.msra.mxu0 %v1462
    %1636 = vmatprep.subr.mxu0 0.0
    %1637 = vmatpush1.xpose.msra.mxu0 %v1463
    %1638 = vmatprep.subr.mxu0 0.0
    %1639 = vmatpush1.xpose.msra.mxu0 %v1464
    %1640 = vmatprep.subr.mxu0 0.0
    %1641 = vmatpush1.xpose.msra.mxu0 %v1465
    %1642 = vmatprep.subr.mxu0 0.0
    %1643 = vmatpush1.xpose.msra.mxu0 %v1466
    %1644 = vmatprep.subr.mxu0 0.0
    %1645 = vmatpush1.xpose.msra.mxu0 %v1467
    %1646 = vmatprep.subr.mxu0 0.0
    %1647 = vmatpush1.xpose.msra.mxu0 %v1468
    %1648 = vmatprep.subr.mxu0 0.0
    %1649 = vmatpush1.xpose.msra.mxu0 0.0
    %1650 = vmatprep.subr.mxu0 0.0
    %1651 = vmatpush1.xpose.msra.mxu0 0.0
    %1652 = vmatprep.subr.mxu0 0.0
    %1653 = vmatpush1.xpose.msra.mxu0 0.0
    %1654 = vmatprep.subr.mxu0 0.0
    %1655 = vmatpush1.xpose.msra.mxu0 0.0
    %1656 = vmatprep.subr.mxu0 0.0
    %1657 = vmatpush1.xpose.msra.mxu0 0.0
    %1658 = vmatprep.subr.mxu0 0.0
    %1659 = vmatpush1.xpose.msra.mxu0 0.0
    %1660 = vmatprep.subr.mxu0 0.0
    %1661 = vmatpush1.xpose.msra.mxu0 0.0
    %1662 = vmatprep.subr.mxu0 0.0
    %1663 = vmatpush1.xpose.msra.mxu0 0.0
    %1664 = vmatprep.subr.mxu0 0.0
    %1665 = vmatpush1.xpose.msra.mxu0 0.0
    %1666 = vmatprep.subr.mxu0 0.0
    %1667 = vmatpush1.xpose.msra.mxu0 0.0
    %1668 = vmatprep.subr.mxu0 0.0
    %1669 = vmatpush1.xpose.msra.mxu0 0.0
    %1670 = vmatprep.subr.mxu0 0.0
    %1671 = vmatpush1.xpose.msra.mxu0 0.0
    %1672 = vmatprep.subr.mxu0 0.0
    %1673 = vmatpush1.xpose.msra.mxu0 0.0
    %1674 = vmatprep.subr.mxu0 0.0
    %1675 = vmatpush1.xpose.msra.mxu0 0.0
    %1676 = vmatprep.subr.mxu0 0.0
    %1677 = vmatpush1.xpose.msra.mxu0 0.0
    %1678 = vmatprep.subr.mxu0 0.0
    %1679 = vmatpush1.xpose.msra.mxu0 0.0
    %1680 = vmatprep.subr.mxu0 0.0
    %1681 = vmatpush1.xpose.msra.mxu0 0.0
    %1682 = vmatprep.subr.mxu0 0.0
    %1683 = vmatpush1.xpose.msra.mxu0 0.0
    %1684 = vmatprep.subr.mxu0 0.0
    %1685 = vmatpush1.xpose.msra.mxu0 0.0
    %1686 = vmatprep.subr.mxu0 0.0
    %1687 = vmatpush1.xpose.msra.mxu0 0.0
    %1688 = vmatprep.mubr.f32.mxu0 0.0
    %1689 = vmatmul.mubr.f32.gmra.mrb[0].mxu0 %v1536
    %v1690 = vpop.f32.mrb[0].mxu0
    %v1691 = vadd.f32 0.0, %v1690
    %v1692 = vpop.f32.mrb[0].mxu0
    %1693 = vdwg.mxu0
    %v1694 = vlaneseq
    %v1695 = vshrl.u32 %v1694, 7
    %v1696 = vsub.s32 0, %v1695
    %v1697 = vrot.slane %v1621, %v1696
    %v1698 = vadd.f32 %v1541, %v1697
    %v1699 = vmul.f32 %v1691, 2.0
    %v1700 = vsub.f32 %v1698, %v1699
    %v1701 = vmax.f32 %v1700, 1e-12
    %v1702 = vrsqrt.pop %v1701
    %v1703 = vmul.f32 %v1701, %v1702
    %vm1704 = vcmp.eq.f32.partialorder %v1701, inf
    %v1705 = vsel %vm1704, %v1701, %v1703
    %vm1706 = vcmp.eq.f32.partialorder %v1701, 0.0
    %v1707 = vand.u32 %v1701, 2147483648
    %v1708 = vsel %vm1706, %v1707, %v1705
    %v1709 = vmul.f32 %v1708, %v40
    %v1710 = vsel %vm54, %v1709, 0.0
    %1711 = vadd.xlane.f32.xlu0 %v1710
    %v1712 = vpop.xlane.xlu0 %1711
    %v1713 = vrot.slane %v1712, 4
    %v1714 = vadd.f32 %v1712, %v1713
    %v1715 = vrot.slane %v1714, 2
    %v1716 = vadd.f32 %v1714, %v1715
    %v1717 = vrot.slane %v1716, 1
    %v1718 = vadd.f32 %v1716, %v1717
    %s1719 = vtos %v1718
    %s1720 = smul.f32 %s1719, 0.010416667
    %v1721 = vsub.f32 0.6, %v1708
    %v1722 = vmax.f32 %v1721, 0.0
    %v1723 = vmul.f32 %v1722, %v312
    %v1724 = vsel %vm54, %v1723, 0.0
    %1725 = vadd.xlane.f32.xlu0 %v1724
    %v1726 = vpop.xlane.xlu0 %1725
    %v1727 = vrot.slane %v1726, 4
    %v1728 = vadd.f32 %v1726, %v1727
    %v1729 = vrot.slane %v1728, 2
    %v1730 = vadd.f32 %v1728, %v1729
    %v1731 = vrot.slane %v1730, 1
    %v1732 = vadd.f32 %v1730, %v1731
    %s1733 = vtos %v1732
    %s1734 = smul.f32 %s1733, 0.0014880953
    %s1735 = sadd.f32 %s1720, %s1734
    %v1736 = vstv %s1735
    %1737 = vst [vmem:[#allocation5 + $0x5] sm:$0x1] %v1736
    %s1738 = scalar_lea.vmem [#allocation2], 576
    %v1739 = vld [vmem:[%s1738] sm:$0xff]
    %v1740 = vld [vmem:[%s1738 + $0x8] sm:$0xff]
    %v1741 = vld [vmem:[%s1738 + $0x10] sm:$0xff]
    %v1742 = vld [vmem:[%s1738 + $0x18] sm:$0xff]
    %v1743 = vld [vmem:[%s1738 + $0x20] sm:$0xff]
    %v1744 = vld [vmem:[%s1738 + $0x28] sm:$0xff]
    %v1745 = vld [vmem:[%s1738 + $0x30] sm:$0xff]
    %v1746 = vld [vmem:[%s1738 + $0x38] sm:$0xff]
    %v1747 = vld [vmem:[%s1738 + $0x40] sm:$0xff]
    %v1748 = vld [vmem:[%s1738 + $0x48] sm:$0xff]
    %v1749 = vld [vmem:[%s1738 + $0x50] sm:$0xff]
    %v1750 = vld [vmem:[%s1738 + $0x58] sm:$0xff]
    %1751 = vmatprep.subr.mxu0 0.0
    %1752 = vmatpush1.msra.mxu0 %v1739
    %1753 = vmatprep.subr.mxu0 0.0
    %1754 = vmatpush1.msra.mxu0 %v1740
    %1755 = vmatprep.subr.mxu0 0.0
    %1756 = vmatpush1.msra.mxu0 %v1741
    %1757 = vmatprep.subr.mxu0 0.0
    %1758 = vmatpush1.msra.mxu0 %v1742
    %1759 = vmatprep.subr.mxu0 0.0
    %1760 = vmatpush1.msra.mxu0 %v1743
    %1761 = vmatprep.subr.mxu0 0.0
    %1762 = vmatpush1.msra.mxu0 %v1744
    %1763 = vmatprep.subr.mxu0 0.0
    %1764 = vmatpush1.msra.mxu0 %v1745
    %1765 = vmatprep.subr.mxu0 0.0
    %1766 = vmatpush1.msra.mxu0 %v1746
    %1767 = vmatprep.subr.mxu0 0.0
    %1768 = vmatpush1.msra.mxu0 %v1747
    %1769 = vmatprep.subr.mxu0 0.0
    %1770 = vmatpush1.msra.mxu0 %v1748
    %1771 = vmatprep.subr.mxu0 0.0
    %1772 = vmatpush1.msra.mxu0 %v1749
    %1773 = vmatprep.subr.mxu0 0.0
    %1774 = vmatpush1.msra.mxu0 %v1750
    %1775 = vmatprep.subr.mxu0 0.0
    %1776 = vmatpush1.msra.mxu0 0.0
    %1777 = vmatprep.subr.mxu0 0.0
    %1778 = vmatpush1.msra.mxu0 0.0
    %1779 = vmatprep.subr.mxu0 0.0
    %1780 = vmatpush1.msra.mxu0 0.0
    %1781 = vmatprep.subr.mxu0 0.0
    %1782 = vmatpush1.msra.mxu0 0.0
    %1783 = vmatprep.subr.mxu0 0.0
    %1784 = vmatpush1.msra.mxu0 0.0
    %1785 = vmatprep.subr.mxu0 0.0
    %1786 = vmatpush1.msra.mxu0 0.0
    %1787 = vmatprep.subr.mxu0 0.0
    %1788 = vmatpush1.msra.mxu0 0.0
    %1789 = vmatprep.subr.mxu0 0.0
    %1790 = vmatpush1.msra.mxu0 0.0
    %1791 = vmatprep.subr.mxu0 0.0
    %1792 = vmatpush1.msra.mxu0 0.0
    %1793 = vmatprep.subr.mxu0 0.0
    %1794 = vmatpush1.msra.mxu0 0.0
    %1795 = vmatprep.subr.mxu0 0.0
    %1796 = vmatpush1.msra.mxu0 0.0
    %1797 = vmatprep.subr.mxu0 0.0
    %1798 = vmatpush1.msra.mxu0 0.0
    %1799 = vmatprep.subr.mxu0 0.0
    %1800 = vmatpush1.msra.mxu0 0.0
    %1801 = vmatprep.subr.mxu0 0.0
    %1802 = vmatpush1.msra.mxu0 0.0
    %1803 = vmatprep.subr.mxu0 0.0
    %1804 = vmatpush1.msra.mxu0 0.0
    %1805 = vmatprep.subr.mxu0 0.0
    %1806 = vmatpush1.msra.mxu0 0.0
    %1807 = vmatprep.subr.mxu0 0.0
    %1808 = vmatpush1.msra.mxu0 0.0
    %1809 = vmatprep.subr.mxu0 0.0
    %1810 = vmatpush1.msra.mxu0 0.0
    %1811 = vmatprep.subr.mxu0 0.0
    %1812 = vmatpush1.msra.mxu0 0.0
    %1813 = vmatprep.subr.mxu0 0.0
    %1814 = vmatpush1.msra.mxu0 0.0
    %1815 = vmatprep.mubr.f32.mxu0 0.0
    %1816 = vmatmul.mubr.f32.gmra.mrb[0].mxu0 %v56
    %v1817 = vpop.f32.mrb[0].mxu0
    %v1818 = vadd.f32 0.0, %v1817
    %v1819 = vpop.f32.mrb[0].mxu0
    %1820 = vdwg.mxu0
    %v1821 = vmul.f32 %v1818, %v1818
    %1822 = vadd.xlane.f32.xlu0 %v1821
    %v1823 = vpop.xlane.xlu0 %1822
    %v1824 = vmul.f32 %v1739, %v1739
    %v1825 = vmul.f32 %v1740, %v1740
    %v1826 = vmul.f32 %v1741, %v1741
    %v1827 = vmul.f32 %v1742, %v1742
    %v1828 = vmul.f32 %v1743, %v1743
    %v1829 = vmul.f32 %v1744, %v1744
    %v1830 = vmul.f32 %v1745, %v1745
    %v1831 = vmul.f32 %v1746, %v1746
    %v1832 = vmul.f32 %v1747, %v1747
    %v1833 = vmul.f32 %v1748, %v1748
    %v1834 = vmul.f32 %v1749, %v1749
    %v1835 = vmul.f32 %v1750, %v1750
    %1836 = vmatprep.subr.mxu0 0.0
    %1837 = vmatpush1.xpose.msra.mxu0 %v1824
    %1838 = vmatprep.subr.mxu0 0.0
    %1839 = vmatpush1.xpose.msra.mxu0 %v1825
    %1840 = vmatprep.subr.mxu0 0.0
    %1841 = vmatpush1.xpose.msra.mxu0 %v1826
    %1842 = vmatprep.subr.mxu0 0.0
    %1843 = vmatpush1.xpose.msra.mxu0 %v1827
    %1844 = vmatprep.subr.mxu0 0.0
    %1845 = vmatpush1.xpose.msra.mxu0 %v1828
    %1846 = vmatprep.subr.mxu0 0.0
    %1847 = vmatpush1.xpose.msra.mxu0 %v1829
    %1848 = vmatprep.subr.mxu0 0.0
    %1849 = vmatpush1.xpose.msra.mxu0 %v1830
    %1850 = vmatprep.subr.mxu0 0.0
    %1851 = vmatpush1.xpose.msra.mxu0 %v1831
    %1852 = vmatprep.subr.mxu0 0.0
    %1853 = vmatpush1.xpose.msra.mxu0 %v1832
    %1854 = vmatprep.subr.mxu0 0.0
    %1855 = vmatpush1.xpose.msra.mxu0 %v1833
    %1856 = vmatprep.subr.mxu0 0.0
    %1857 = vmatpush1.xpose.msra.mxu0 %v1834
    %1858 = vmatprep.subr.mxu0 0.0
    %1859 = vmatpush1.xpose.msra.mxu0 %v1835
    %1860 = vmatprep.subr.mxu0 0.0
    %1861 = vmatpush1.xpose.msra.mxu0 0.0
    %1862 = vmatprep.subr.mxu0 0.0
    %1863 = vmatpush1.xpose.msra.mxu0 0.0
    %1864 = vmatprep.subr.mxu0 0.0
    %1865 = vmatpush1.xpose.msra.mxu0 0.0
    %1866 = vmatprep.subr.mxu0 0.0
    %1867 = vmatpush1.xpose.msra.mxu0 0.0
    %1868 = vmatprep.subr.mxu0 0.0
    %1869 = vmatpush1.xpose.msra.mxu0 0.0
    %1870 = vmatprep.subr.mxu0 0.0
    %1871 = vmatpush1.xpose.msra.mxu0 0.0
    %1872 = vmatprep.subr.mxu0 0.0
    %1873 = vmatpush1.xpose.msra.mxu0 0.0
    %1874 = vmatprep.subr.mxu0 0.0
    %1875 = vmatpush1.xpose.msra.mxu0 0.0
    %1876 = vmatprep.subr.mxu0 0.0
    %1877 = vmatpush1.xpose.msra.mxu0 0.0
    %1878 = vmatprep.subr.mxu0 0.0
    %1879 = vmatpush1.xpose.msra.mxu0 0.0
    %1880 = vmatprep.subr.mxu0 0.0
    %1881 = vmatpush1.xpose.msra.mxu0 0.0
    %1882 = vmatprep.subr.mxu0 0.0
    %1883 = vmatpush1.xpose.msra.mxu0 0.0
    %1884 = vmatprep.subr.mxu0 0.0
    %1885 = vmatpush1.xpose.msra.mxu0 0.0
    %1886 = vmatprep.subr.mxu0 0.0
    %1887 = vmatpush1.xpose.msra.mxu0 0.0
    %1888 = vmatprep.subr.mxu0 0.0
    %1889 = vmatpush1.xpose.msra.mxu0 0.0
    %1890 = vmatprep.subr.mxu0 0.0
    %1891 = vmatpush1.xpose.msra.mxu0 0.0
    %1892 = vmatprep.subr.mxu0 0.0
    %1893 = vmatpush1.xpose.msra.mxu0 0.0
    %1894 = vmatprep.subr.mxu0 0.0
    %1895 = vmatpush1.xpose.msra.mxu0 0.0
    %1896 = vmatprep.subr.mxu0 0.0
    %1897 = vmatpush1.xpose.msra.mxu0 0.0
    %1898 = vmatprep.subr.mxu0 0.0
    %1899 = vmatpush1.xpose.msra.mxu0 0.0
    %1900 = vmatprep.mubr.f32.mxu0 0.0
    %1901 = vmatmul.mubr.f32.gmra.mrb[0].mxu0 1.0
    %v1902 = vpop.f32.mrb[0].mxu0
    %v1903 = vadd.f32 0.0, %v1902
    %v1904 = vpop.f32.mrb[0].mxu0
    %1905 = vdwg.mxu0
    %1906 = vmatprep.subr.mxu0 0.0
    %1907 = vmatpush1.xpose.msra.mxu0 %v1739
    %1908 = vmatprep.subr.mxu0 0.0
    %1909 = vmatpush1.xpose.msra.mxu0 %v1740
    %1910 = vmatprep.subr.mxu0 0.0
    %1911 = vmatpush1.xpose.msra.mxu0 %v1741
    %1912 = vmatprep.subr.mxu0 0.0
    %1913 = vmatpush1.xpose.msra.mxu0 %v1742
    %1914 = vmatprep.subr.mxu0 0.0
    %1915 = vmatpush1.xpose.msra.mxu0 %v1743
    %1916 = vmatprep.subr.mxu0 0.0
    %1917 = vmatpush1.xpose.msra.mxu0 %v1744
    %1918 = vmatprep.subr.mxu0 0.0
    %1919 = vmatpush1.xpose.msra.mxu0 %v1745
    %1920 = vmatprep.subr.mxu0 0.0
    %1921 = vmatpush1.xpose.msra.mxu0 %v1746
    %1922 = vmatprep.subr.mxu0 0.0
    %1923 = vmatpush1.xpose.msra.mxu0 %v1747
    %1924 = vmatprep.subr.mxu0 0.0
    %1925 = vmatpush1.xpose.msra.mxu0 %v1748
    %1926 = vmatprep.subr.mxu0 0.0
    %1927 = vmatpush1.xpose.msra.mxu0 %v1749
    %1928 = vmatprep.subr.mxu0 0.0
    %1929 = vmatpush1.xpose.msra.mxu0 %v1750
    %1930 = vmatprep.subr.mxu0 0.0
    %1931 = vmatpush1.xpose.msra.mxu0 0.0
    %1932 = vmatprep.subr.mxu0 0.0
    %1933 = vmatpush1.xpose.msra.mxu0 0.0
    %1934 = vmatprep.subr.mxu0 0.0
    %1935 = vmatpush1.xpose.msra.mxu0 0.0
    %1936 = vmatprep.subr.mxu0 0.0
    %1937 = vmatpush1.xpose.msra.mxu0 0.0
    %1938 = vmatprep.subr.mxu0 0.0
    %1939 = vmatpush1.xpose.msra.mxu0 0.0
    %1940 = vmatprep.subr.mxu0 0.0
    %1941 = vmatpush1.xpose.msra.mxu0 0.0
    %1942 = vmatprep.subr.mxu0 0.0
    %1943 = vmatpush1.xpose.msra.mxu0 0.0
    %1944 = vmatprep.subr.mxu0 0.0
    %1945 = vmatpush1.xpose.msra.mxu0 0.0
    %1946 = vmatprep.subr.mxu0 0.0
    %1947 = vmatpush1.xpose.msra.mxu0 0.0
    %1948 = vmatprep.subr.mxu0 0.0
    %1949 = vmatpush1.xpose.msra.mxu0 0.0
    %1950 = vmatprep.subr.mxu0 0.0
    %1951 = vmatpush1.xpose.msra.mxu0 0.0
    %1952 = vmatprep.subr.mxu0 0.0
    %1953 = vmatpush1.xpose.msra.mxu0 0.0
    %1954 = vmatprep.subr.mxu0 0.0
    %1955 = vmatpush1.xpose.msra.mxu0 0.0
    %1956 = vmatprep.subr.mxu0 0.0
    %1957 = vmatpush1.xpose.msra.mxu0 0.0
    %1958 = vmatprep.subr.mxu0 0.0
    %1959 = vmatpush1.xpose.msra.mxu0 0.0
    %1960 = vmatprep.subr.mxu0 0.0
    %1961 = vmatpush1.xpose.msra.mxu0 0.0
    %1962 = vmatprep.subr.mxu0 0.0
    %1963 = vmatpush1.xpose.msra.mxu0 0.0
    %1964 = vmatprep.subr.mxu0 0.0
    %1965 = vmatpush1.xpose.msra.mxu0 0.0
    %1966 = vmatprep.subr.mxu0 0.0
    %1967 = vmatpush1.xpose.msra.mxu0 0.0
    %1968 = vmatprep.subr.mxu0 0.0
    %1969 = vmatpush1.xpose.msra.mxu0 0.0
    %1970 = vmatprep.mubr.f32.mxu0 0.0
    %1971 = vmatmul.mubr.f32.gmra.mrb[0].mxu0 %v1818
    %v1972 = vpop.f32.mrb[0].mxu0
    %v1973 = vadd.f32 0.0, %v1972
    %v1974 = vpop.f32.mrb[0].mxu0
    %1975 = vdwg.mxu0
    %v1976 = vlaneseq
    %v1977 = vshrl.u32 %v1976, 7
    %v1978 = vsub.s32 0, %v1977
    %v1979 = vrot.slane %v1903, %v1978
    %v1980 = vadd.f32 %v1823, %v1979
    %v1981 = vmul.f32 %v1973, 2.0
    %v1982 = vsub.f32 %v1980, %v1981
    %v1983 = vmax.f32 %v1982, 1e-12
    %v1984 = vrsqrt.pop %v1983
    %v1985 = vmul.f32 %v1983, %v1984
    %vm1986 = vcmp.eq.f32.partialorder %v1983, inf
    %v1987 = vsel %vm1986, %v1983, %v1985
    %vm1988 = vcmp.eq.f32.partialorder %v1983, 0.0
    %v1989 = vand.u32 %v1983, 2147483648
    %v1990 = vsel %vm1988, %v1989, %v1987
    %v1991 = vmul.f32 %v1990, %v40
    %v1992 = vsel %vm54, %v1991, 0.0
    %1993 = vadd.xlane.f32.xlu0 %v1992
    %v1994 = vpop.xlane.xlu0 %1993
    %v1995 = vrot.slane %v1994, 4
    %v1996 = vadd.f32 %v1994, %v1995
    %v1997 = vrot.slane %v1996, 2
    %v1998 = vadd.f32 %v1996, %v1997
    %v1999 = vrot.slane %v1998, 1
    %v2000 = vadd.f32 %v1998, %v1999
    %s2001 = vtos %v2000
    %s2002 = smul.f32 %s2001, 0.010416667
    %v2003 = vsub.f32 0.6, %v1990
    %v2004 = vmax.f32 %v2003, 0.0
    %v2005 = vmul.f32 %v2004, %v312
    %v2006 = vsel %vm54, %v2005, 0.0
    %2007 = vadd.xlane.f32.xlu0 %v2006
    %v2008 = vpop.xlane.xlu0 %2007
    %v2009 = vrot.slane %v2008, 4
    %v2010 = vadd.f32 %v2008, %v2009
    %v2011 = vrot.slane %v2010, 2
    %v2012 = vadd.f32 %v2010, %v2011
    %v2013 = vrot.slane %v2012, 1
    %v2014 = vadd.f32 %v2012, %v2013
    %s2015 = vtos %v2014
    %s2016 = smul.f32 %s2015, 0.0014880953
    %s2017 = sadd.f32 %s2002, %s2016
    %v2018 = vstv %s2017
    %2019 = vst [vmem:[#allocation5 + $0x6] sm:$0x1] %v2018
    %s2020 = scalar_lea.vmem [#allocation2], 672
    %v2021 = vld [vmem:[%s2020] sm:$0xff]
    %v2022 = vld [vmem:[%s2020 + $0x8] sm:$0xff]
    %v2023 = vld [vmem:[%s2020 + $0x10] sm:$0xff]
    %v2024 = vld [vmem:[%s2020 + $0x18] sm:$0xff]
    %v2025 = vld [vmem:[%s2020 + $0x20] sm:$0xff]
    %v2026 = vld [vmem:[%s2020 + $0x28] sm:$0xff]
    %v2027 = vld [vmem:[%s2020 + $0x30] sm:$0xff]
    %v2028 = vld [vmem:[%s2020 + $0x38] sm:$0xff]
    %v2029 = vld [vmem:[%s2020 + $0x40] sm:$0xff]
    %v2030 = vld [vmem:[%s2020 + $0x48] sm:$0xff]
    %v2031 = vld [vmem:[%s2020 + $0x50] sm:$0xff]
    %v2032 = vld [vmem:[%s2020 + $0x58] sm:$0xff]
    %2033 = vmatprep.subr.mxu0 0.0
    %2034 = vmatpush1.msra.mxu0 %v2021
    %2035 = vmatprep.subr.mxu0 0.0
    %2036 = vmatpush1.msra.mxu0 %v2022
    %2037 = vmatprep.subr.mxu0 0.0
    %2038 = vmatpush1.msra.mxu0 %v2023
    %2039 = vmatprep.subr.mxu0 0.0
    %2040 = vmatpush1.msra.mxu0 %v2024
    %2041 = vmatprep.subr.mxu0 0.0
    %2042 = vmatpush1.msra.mxu0 %v2025
    %2043 = vmatprep.subr.mxu0 0.0
    %2044 = vmatpush1.msra.mxu0 %v2026
    %2045 = vmatprep.subr.mxu0 0.0
    %2046 = vmatpush1.msra.mxu0 %v2027
    %2047 = vmatprep.subr.mxu0 0.0
    %2048 = vmatpush1.msra.mxu0 %v2028
    %2049 = vmatprep.subr.mxu0 0.0
    %2050 = vmatpush1.msra.mxu0 %v2029
    %2051 = vmatprep.subr.mxu0 0.0
    %2052 = vmatpush1.msra.mxu0 %v2030
    %2053 = vmatprep.subr.mxu0 0.0
    %2054 = vmatpush1.msra.mxu0 %v2031
    %2055 = vmatprep.subr.mxu0 0.0
    %2056 = vmatpush1.msra.mxu0 %v2032
    %2057 = vmatprep.subr.mxu0 0.0
    %2058 = vmatpush1.msra.mxu0 0.0
    %2059 = vmatprep.subr.mxu0 0.0
    %2060 = vmatpush1.msra.mxu0 0.0
    %2061 = vmatprep.subr.mxu0 0.0
    %2062 = vmatpush1.msra.mxu0 0.0
    %2063 = vmatprep.subr.mxu0 0.0
    %2064 = vmatpush1.msra.mxu0 0.0
    %2065 = vmatprep.subr.mxu0 0.0
    %2066 = vmatpush1.msra.mxu0 0.0
    %2067 = vmatprep.subr.mxu0 0.0
    %2068 = vmatpush1.msra.mxu0 0.0
    %2069 = vmatprep.subr.mxu0 0.0
    %2070 = vmatpush1.msra.mxu0 0.0
    %2071 = vmatprep.subr.mxu0 0.0
    %2072 = vmatpush1.msra.mxu0 0.0
    %2073 = vmatprep.subr.mxu0 0.0
    %2074 = vmatpush1.msra.mxu0 0.0
    %2075 = vmatprep.subr.mxu0 0.0
    %2076 = vmatpush1.msra.mxu0 0.0
    %2077 = vmatprep.subr.mxu0 0.0
    %2078 = vmatpush1.msra.mxu0 0.0
    %2079 = vmatprep.subr.mxu0 0.0
    %2080 = vmatpush1.msra.mxu0 0.0
    %2081 = vmatprep.subr.mxu0 0.0
    %2082 = vmatpush1.msra.mxu0 0.0
    %2083 = vmatprep.subr.mxu0 0.0
    %2084 = vmatpush1.msra.mxu0 0.0
    %2085 = vmatprep.subr.mxu0 0.0
    %2086 = vmatpush1.msra.mxu0 0.0
    %2087 = vmatprep.subr.mxu0 0.0
    %2088 = vmatpush1.msra.mxu0 0.0
    %2089 = vmatprep.subr.mxu0 0.0
    %2090 = vmatpush1.msra.mxu0 0.0
    %2091 = vmatprep.subr.mxu0 0.0
    %2092 = vmatpush1.msra.mxu0 0.0
    %2093 = vmatprep.subr.mxu0 0.0
    %2094 = vmatpush1.msra.mxu0 0.0
    %2095 = vmatprep.subr.mxu0 0.0
    %2096 = vmatpush1.msra.mxu0 0.0
    %2097 = vmatprep.mubr.f32.mxu0 0.0
    %2098 = vmatmul.mubr.f32.gmra.mrb[0].mxu0 %v56
    %v2099 = vpop.f32.mrb[0].mxu0
    %v2100 = vadd.f32 0.0, %v2099
    %v2101 = vpop.f32.mrb[0].mxu0
    %2102 = vdwg.mxu0
    %v2103 = vmul.f32 %v2100, %v2100
    %2104 = vadd.xlane.f32.xlu0 %v2103
    %v2105 = vpop.xlane.xlu0 %2104
    %v2106 = vmul.f32 %v2021, %v2021
    %v2107 = vmul.f32 %v2022, %v2022
    %v2108 = vmul.f32 %v2023, %v2023
    %v2109 = vmul.f32 %v2024, %v2024
    %v2110 = vmul.f32 %v2025, %v2025
    %v2111 = vmul.f32 %v2026, %v2026
    %v2112 = vmul.f32 %v2027, %v2027
    %v2113 = vmul.f32 %v2028, %v2028
    %v2114 = vmul.f32 %v2029, %v2029
    %v2115 = vmul.f32 %v2030, %v2030
    %v2116 = vmul.f32 %v2031, %v2031
    %v2117 = vmul.f32 %v2032, %v2032
    %2118 = vmatprep.subr.mxu0 0.0
    %2119 = vmatpush1.xpose.msra.mxu0 %v2106
    %2120 = vmatprep.subr.mxu0 0.0
    %2121 = vmatpush1.xpose.msra.mxu0 %v2107
    %2122 = vmatprep.subr.mxu0 0.0
    %2123 = vmatpush1.xpose.msra.mxu0 %v2108
    %2124 = vmatprep.subr.mxu0 0.0
    %2125 = vmatpush1.xpose.msra.mxu0 %v2109
    %2126 = vmatprep.subr.mxu0 0.0
    %2127 = vmatpush1.xpose.msra.mxu0 %v2110
    %2128 = vmatprep.subr.mxu0 0.0
    %2129 = vmatpush1.xpose.msra.mxu0 %v2111
    %2130 = vmatprep.subr.mxu0 0.0
    %2131 = vmatpush1.xpose.msra.mxu0 %v2112
    %2132 = vmatprep.subr.mxu0 0.0
    %2133 = vmatpush1.xpose.msra.mxu0 %v2113
    %2134 = vmatprep.subr.mxu0 0.0
    %2135 = vmatpush1.xpose.msra.mxu0 %v2114
    %2136 = vmatprep.subr.mxu0 0.0
    %2137 = vmatpush1.xpose.msra.mxu0 %v2115
    %2138 = vmatprep.subr.mxu0 0.0
    %2139 = vmatpush1.xpose.msra.mxu0 %v2116
    %2140 = vmatprep.subr.mxu0 0.0
    %2141 = vmatpush1.xpose.msra.mxu0 %v2117
    %2142 = vmatprep.subr.mxu0 0.0
    %2143 = vmatpush1.xpose.msra.mxu0 0.0
    %2144 = vmatprep.subr.mxu0 0.0
    %2145 = vmatpush1.xpose.msra.mxu0 0.0
    %2146 = vmatprep.subr.mxu0 0.0
    %2147 = vmatpush1.xpose.msra.mxu0 0.0
    %2148 = vmatprep.subr.mxu0 0.0
    %2149 = vmatpush1.xpose.msra.mxu0 0.0
    %2150 = vmatprep.subr.mxu0 0.0
    %2151 = vmatpush1.xpose.msra.mxu0 0.0
    %2152 = vmatprep.subr.mxu0 0.0
    %2153 = vmatpush1.xpose.msra.mxu0 0.0
    %2154 = vmatprep.subr.mxu0 0.0
    %2155 = vmatpush1.xpose.msra.mxu0 0.0
    %2156 = vmatprep.subr.mxu0 0.0
    %2157 = vmatpush1.xpose.msra.mxu0 0.0
    %2158 = vmatprep.subr.mxu0 0.0
    %2159 = vmatpush1.xpose.msra.mxu0 0.0
    %2160 = vmatprep.subr.mxu0 0.0
    %2161 = vmatpush1.xpose.msra.mxu0 0.0
    %2162 = vmatprep.subr.mxu0 0.0
    %2163 = vmatpush1.xpose.msra.mxu0 0.0
    %2164 = vmatprep.subr.mxu0 0.0
    %2165 = vmatpush1.xpose.msra.mxu0 0.0
    %2166 = vmatprep.subr.mxu0 0.0
    %2167 = vmatpush1.xpose.msra.mxu0 0.0
    %2168 = vmatprep.subr.mxu0 0.0
    %2169 = vmatpush1.xpose.msra.mxu0 0.0
    %2170 = vmatprep.subr.mxu0 0.0
    %2171 = vmatpush1.xpose.msra.mxu0 0.0
    %2172 = vmatprep.subr.mxu0 0.0
    %2173 = vmatpush1.xpose.msra.mxu0 0.0
    %2174 = vmatprep.subr.mxu0 0.0
    %2175 = vmatpush1.xpose.msra.mxu0 0.0
    %2176 = vmatprep.subr.mxu0 0.0
    %2177 = vmatpush1.xpose.msra.mxu0 0.0
    %2178 = vmatprep.subr.mxu0 0.0
    %2179 = vmatpush1.xpose.msra.mxu0 0.0
    %2180 = vmatprep.subr.mxu0 0.0
    %2181 = vmatpush1.xpose.msra.mxu0 0.0
    %2182 = vmatprep.mubr.f32.mxu0 0.0
    %2183 = vmatmul.mubr.f32.gmra.mrb[0].mxu0 1.0
    %v2184 = vpop.f32.mrb[0].mxu0
    %v2185 = vadd.f32 0.0, %v2184
    %v2186 = vpop.f32.mrb[0].mxu0
    %2187 = vdwg.mxu0
    %2188 = vmatprep.subr.mxu0 0.0
    %2189 = vmatpush1.xpose.msra.mxu0 %v2021
    %2190 = vmatprep.subr.mxu0 0.0
    %2191 = vmatpush1.xpose.msra.mxu0 %v2022
    %2192 = vmatprep.subr.mxu0 0.0
    %2193 = vmatpush1.xpose.msra.mxu0 %v2023
    %2194 = vmatprep.subr.mxu0 0.0
    %2195 = vmatpush1.xpose.msra.mxu0 %v2024
    %2196 = vmatprep.subr.mxu0 0.0
    %2197 = vmatpush1.xpose.msra.mxu0 %v2025
    %2198 = vmatprep.subr.mxu0 0.0
    %2199 = vmatpush1.xpose.msra.mxu0 %v2026
    %2200 = vmatprep.subr.mxu0 0.0
    %2201 = vmatpush1.xpose.msra.mxu0 %v2027
    %2202 = vmatprep.subr.mxu0 0.0
    %2203 = vmatpush1.xpose.msra.mxu0 %v2028
    %2204 = vmatprep.subr.mxu0 0.0
    %2205 = vmatpush1.xpose.msra.mxu0 %v2029
    %2206 = vmatprep.subr.mxu0 0.0
    %2207 = vmatpush1.xpose.msra.mxu0 %v2030
    %2208 = vmatprep.subr.mxu0 0.0
    %2209 = vmatpush1.xpose.msra.mxu0 %v2031
    %2210 = vmatprep.subr.mxu0 0.0
    %2211 = vmatpush1.xpose.msra.mxu0 %v2032
    %2212 = vmatprep.subr.mxu0 0.0
    %2213 = vmatpush1.xpose.msra.mxu0 0.0
    %2214 = vmatprep.subr.mxu0 0.0
    %2215 = vmatpush1.xpose.msra.mxu0 0.0
    %2216 = vmatprep.subr.mxu0 0.0
    %2217 = vmatpush1.xpose.msra.mxu0 0.0
    %2218 = vmatprep.subr.mxu0 0.0
    %2219 = vmatpush1.xpose.msra.mxu0 0.0
    %2220 = vmatprep.subr.mxu0 0.0
    %2221 = vmatpush1.xpose.msra.mxu0 0.0
    %2222 = vmatprep.subr.mxu0 0.0
    %2223 = vmatpush1.xpose.msra.mxu0 0.0
    %2224 = vmatprep.subr.mxu0 0.0
    %2225 = vmatpush1.xpose.msra.mxu0 0.0
    %2226 = vmatprep.subr.mxu0 0.0
    %2227 = vmatpush1.xpose.msra.mxu0 0.0
    %2228 = vmatprep.subr.mxu0 0.0
    %2229 = vmatpush1.xpose.msra.mxu0 0.0
    %2230 = vmatprep.subr.mxu0 0.0
    %2231 = vmatpush1.xpose.msra.mxu0 0.0
    %2232 = vmatprep.subr.mxu0 0.0
    %2233 = vmatpush1.xpose.msra.mxu0 0.0
    %2234 = vmatprep.subr.mxu0 0.0
    %2235 = vmatpush1.xpose.msra.mxu0 0.0
    %2236 = vmatprep.subr.mxu0 0.0
    %2237 = vmatpush1.xpose.msra.mxu0 0.0
    %2238 = vmatprep.subr.mxu0 0.0
    %2239 = vmatpush1.xpose.msra.mxu0 0.0
    %2240 = vmatprep.subr.mxu0 0.0
    %2241 = vmatpush1.xpose.msra.mxu0 0.0
    %2242 = vmatprep.subr.mxu0 0.0
    %2243 = vmatpush1.xpose.msra.mxu0 0.0
    %2244 = vmatprep.subr.mxu0 0.0
    %2245 = vmatpush1.xpose.msra.mxu0 0.0
    %2246 = vmatprep.subr.mxu0 0.0
    %2247 = vmatpush1.xpose.msra.mxu0 0.0
    %2248 = vmatprep.subr.mxu0 0.0
    %2249 = vmatpush1.xpose.msra.mxu0 0.0
    %2250 = vmatprep.subr.mxu0 0.0
    %2251 = vmatpush1.xpose.msra.mxu0 0.0
    %2252 = vmatprep.mubr.f32.mxu0 0.0
    %2253 = vmatmul.mubr.f32.gmra.mrb[0].mxu0 %v2100
    %v2254 = vpop.f32.mrb[0].mxu0
    %v2255 = vadd.f32 0.0, %v2254
    %v2256 = vpop.f32.mrb[0].mxu0
    %2257 = vdwg.mxu0
    %v2258 = vlaneseq
    %v2259 = vshrl.u32 %v2258, 7
    %v2260 = vsub.s32 0, %v2259
    %v2261 = vrot.slane %v2185, %v2260
    %v2262 = vadd.f32 %v2105, %v2261
    %v2263 = vmul.f32 %v2255, 2.0
    %v2264 = vsub.f32 %v2262, %v2263
    %v2265 = vmax.f32 %v2264, 1e-12
    %v2266 = vrsqrt.pop %v2265
    %v2267 = vmul.f32 %v2265, %v2266
    %vm2268 = vcmp.eq.f32.partialorder %v2265, inf
    %v2269 = vsel %vm2268, %v2265, %v2267
    %vm2270 = vcmp.eq.f32.partialorder %v2265, 0.0
    %v2271 = vand.u32 %v2265, 2147483648
    %v2272 = vsel %vm2270, %v2271, %v2269
    %v2273 = vmul.f32 %v2272, %v40
    %v2274 = vsel %vm54, %v2273, 0.0
    %2275 = vadd.xlane.f32.xlu0 %v2274
    %v2276 = vpop.xlane.xlu0 %2275
    %v2277 = vrot.slane %v2276, 4
    %v2278 = vadd.f32 %v2276, %v2277
    %v2279 = vrot.slane %v2278, 2
    %v2280 = vadd.f32 %v2278, %v2279
    %v2281 = vrot.slane %v2280, 1
    %v2282 = vadd.f32 %v2280, %v2281
    %s2283 = vtos %v2282
    %s2284 = smul.f32 %s2283, 0.010416667
    %v2285 = vsub.f32 0.6, %v2272
    %v2286 = vmax.f32 %v2285, 0.0
    %v2287 = vmul.f32 %v2286, %v312
    %v2288 = vsel %vm54, %v2287, 0.0
    %2289 = vadd.xlane.f32.xlu0 %v2288
    %v2290 = vpop.xlane.xlu0 %2289
    %v2291 = vrot.slane %v2290, 4
    %v2292 = vadd.f32 %v2290, %v2291
    %v2293 = vrot.slane %v2292, 2
    %v2294 = vadd.f32 %v2292, %v2293
    %v2295 = vrot.slane %v2294, 1
    %v2296 = vadd.f32 %v2294, %v2295
    %s2297 = vtos %v2296
    %s2298 = smul.f32 %s2297, 0.0014880953
    %s2299 = sadd.f32 %s2284, %s2298
    %v2300 = vstv %s2299
    %2301 = vst [vmem:[#allocation5 + $0x7] sm:$0x1] %v2300
    // Predicated region
    $region10: #{tpu_custom_call.1} parent=1 // pred_check
      _
    $region11: #{tpu_custom_call.1} parent=1 // pred_check_branch
      %2303 = sbr.rel (0) target = $region13
    $region12: #{tpu_custom_call.1} parent=1 // pred_region
      %s2305 = ssub.s32 128, 128
      %2306 = vsyncadd [#allocation4], %s2305
      %s2308 = sshll.u32 [#allocation5], 4
      %s2309 = int_to_ptr.vmem [resolvable:$true] %s2308
      %2311 = dma.vmem_to_hbm [thread:$0]  %s2309, 128, %s1, [#allocation4]
    $region13: #{tpu_custom_call.1} parent=1 // pred_fallthru
      _
    // Predicated region
    $region14: #{tpu_custom_call.1} parent=1 // pred_check
      _
    $region15: #{tpu_custom_call.1} parent=1 // pred_check_branch
      %2313 = sbr.rel (0) target = $region17
    $region16: #{tpu_custom_call.1} parent=1 // pred_region
      %2314 = dma.done [#allocation4], 128
    $region17: #{tpu_custom_call.1} parent=1 // pred_fallthru
      _
    %2315 = vsyncpa [#allocation3], 1
    %2316 = vsyncpa [#allocation4], 1

</llo_original>
